<compile_context>
chip_gen: v5e
topology: v5e:2x2
jax: 0.10.0
libtpu: 0.0.40
codegen_flags: <defaults>
</compile_context>

<pallas_src>
import jax
import jax.numpy as jnp
from jax.experimental import pallas as pl
from jax.experimental.pallas import tpu as pltpu


# ------------------------------ fused kernel ------------------------------- #
def _decoder_block_kernel(x_ref, w1_ref, b1_ref, w2_ref, b2_ref, o_ref,
                          xpad_ref, hpad_ref):
    """One batch element per grid step.

    x_ref   : (1, H, W, Cin)        input (channels in lanes)
    w1_ref  : (9*Cin, Cmid)         im2col-flattened conv1 weight
    b1_ref  : (1, Cmid)             conv1 bias
    w2_ref  : (4*Cmid, 4*Cout)      polyphase deconv weight (block sparse)
    b2_ref  : (1, 4*Cout)           deconv bias, tiled over the 4 parities
    o_ref   : (1, 4*Cout, H*W)      4 output parities, lane-dense (H*W lanes)
    xpad_ref: VMEM (H+2, W+2, Cin)  zero-halo'ed input scratch
    hpad_ref: VMEM (H+1, W+1, Cmid) intermediate h with bottom/right zero pad
    """
    _, H, W, Cin = x_ref.shape
    Cmid = w1_ref.shape[1]
    HW = H * W

    # ---------- stage 1: conv3x3 (padding=1) + bias + ReLU ----------
    # Build the 1-pixel zero halo inside the kernel (no XLA pad).
    xpad_ref[...] = jnp.zeros_like(xpad_ref)
    xpad_ref[1:H + 1, 1:W + 1, :] = x_ref[0]

    # im2col: stack the 9 taps along the channel (lane) dim -> one MXU matmul.
    taps = [xpad_ref[dy:dy + H, dx:dx + W, :].reshape(HW, Cin)
            for dy in range(3) for dx in range(3)]
    patches = jnp.concatenate(taps, axis=1)                    # (HW, 9*Cin)
    h = jnp.dot(patches, w1_ref[...], preferred_element_type=jnp.float32)
    h = jnp.maximum(h + b1_ref[...], 0.0)                      # (HW, Cmid)

    # ---------- stage 2: ConvTranspose2d(k3, s2, p1, op1) + ReLU ----------
    # Polyphase form: the 4 output parities only need h and its (v+1), (u+1),
    # (u+1, v+1) shifts (zero past the edge).  Keep h in VMEM, padded by one
    # zero row/col at the bottom/right so the shifts are plain slices.
    hpad_ref[...] = jnp.zeros_like(hpad_ref)
    hpad_ref[:H, :W, :] = h.reshape(H, W, Cmid)

    h_r = hpad_ref[0:H, 1:W + 1, :].reshape(HW, Cmid)          # h[u, v+1]
    h_d = hpad_ref[1:H + 1, 0:W, :].reshape(HW, Cmid)          # h[u+1, v]
    h_rd = hpad_ref[1:H + 1, 1:W + 1, :].reshape(HW, Cmid)     # h[u+1, v+1]
    hstack = jnp.concatenate([h, h_r, h_d, h_rd], axis=1)      # (HW, 4*Cmid)

    y = jnp.dot(hstack, w2_ref[...], preferred_element_type=jnp.float32)
    y = jnp.maximum(y + b2_ref[...], 0.0)                      # (HW, 4*Cout)

    # Lane-dense store: parities*channels in sublanes, flattened HW in lanes.
    o_ref[0] = y.T.astype(o_ref.dtype)                         # (4*Cout, HW)


# ------------------------ one-time weight reformatting ---------------------- #
def prepare_params(params):
    """Reformat PyTorch-layout weights for the kernel (call once, outside jit)."""
    w1 = jnp.asarray(params["conv1_w"], jnp.float32)    # (Cmid, Cin, 3, 3)  OIHW
    b1 = jnp.asarray(params["conv1_b"], jnp.float32)    # (Cmid,)
    w2 = jnp.asarray(params["deconv_w"], jnp.float32)   # (Cmid, Cout, 3, 3) (in,out,kH,kW)
    b2 = jnp.asarray(params["deconv_b"], jnp.float32)   # (Cout,)
    Cmid, Cin = w1.shape[0], w1.shape[1]
    Cout = w2.shape[1]

    # conv1 -> im2col layout: rows ordered (dy, dx, ci), columns = co.
    w1t = jnp.transpose(w1, (2, 3, 1, 0)).reshape(9 * Cin, Cmid)

    # Deconv polyphase matrix.  Output parities p = py*2 + px (py, px in {0,1}):
    #   y[2u,   2v  ] = W(1,1) h[u,v]
    #   y[2u,   2v+1] = W(1,2) h[u,v] + W(1,0) h[u,v+1]
    #   y[2u+1, 2v  ] = W(2,1) h[u,v] + W(0,1) h[u+1,v]
    #   y[2u+1, 2v+1] = W(2,2) h[u,v] + W(2,0) h[u,v+1] + W(0,2) h[u+1,v] + W(0,0) h[u+1,v+1]
    # Row blocks of w2pt correspond to [h, h(v+1), h(u+1), h(u+1,v+1)];
    # column blocks correspond to parities [p=0, p=1, p=2, p=3].
    def tap(ky, kx):
        return w2[:, :, ky, kx]                          # (Cmid, Cout)
    z = jnp.zeros((Cmid, Cout), jnp.float32)
    w2pt = jnp.concatenate([
        jnp.concatenate([tap(1, 1), tap(1, 2), tap(2, 1), tap(2, 2)], axis=1),
        jnp.concatenate([z,         tap(1, 0), z,         tap(2, 0)], axis=1),
        jnp.concatenate([z,         z,         tap(0, 1), tap(0, 2)], axis=1),
        jnp.concatenate([z,         z,         z,         tap(0, 0)], axis=1),
    ], axis=0)                                           # (4*Cmid, 4*Cout)

    return {"w1t": w1t, "b1": b1.reshape(1, Cmid),
            "w2pt": w2pt, "b2": jnp.tile(b2, 4).reshape(1, 4 * Cout)}


# ------------------------------- forward pass ------------------------------- #
@jax.jit
def decoder_block(x_nchw, prep):
    w1t, b1, w2pt, b2 = prep["w1t"], prep["b1"], prep["w2pt"], prep["b2"]
    N, Cin, H, W = x_nchw.shape
    Cmid = w1t.shape[1]
    Cout4 = w2pt.shape[1]
    Cout = Cout4 // 4
    HW = H * W

    x_nhwc = jnp.transpose(x_nchw, (0, 2, 3, 1))   # tiny; channels -> lanes

    out = pl.pallas_call(
        _decoder_block_kernel,
        out_shape=jax.ShapeDtypeStruct((N, Cout4, HW), x_nchw.dtype),
        grid=(N,),
        in_specs=[
            pl.BlockSpec((1, H, W, Cin), lambda n: (n, 0, 0, 0)),
            pl.BlockSpec((9 * Cin, Cmid), lambda n: (0, 0)),
            pl.BlockSpec((1, Cmid), lambda n: (0, 0)),
            pl.BlockSpec((4 * Cmid, Cout4), lambda n: (0, 0)),
            pl.BlockSpec((1, Cout4), lambda n: (0, 0)),
        ],
        out_specs=pl.BlockSpec((1, Cout4, HW), lambda n: (n, 0, 0)),
        scratch_shapes=[
            pltpu.VMEM((H + 2, W + 2, Cin), jnp.float32),
            pltpu.VMEM((H + 1, W + 1, Cmid), jnp.float32),
        ],
        compiler_params=pltpu.CompilerParams(
            dimension_semantics=("parallel",)),
    )(x_nhwc, w1t, b1, w2pt, b2)

    # De-interleave the 4 stride-2 parities: (N, 4*Cout, H*W) -> (N, Cout, 2H, 2W).
    y = out.reshape(N, 2, 2, Cout, H, W)           # (n, py, px, co, u, v)
    y = jnp.transpose(y, (0, 3, 4, 1, 5, 2))       # (n, co, u, py, v, px)
    return y.reshape(N, Cout, 2 * H, 2 * W)


# ----------------------------- reference (lax) ------------------------------ #
def decoder_block_ref(x_nchw, params):
    h = jax.lax.conv_general_dilated(
        x_nchw, params["conv1_w"], (1, 1), ((1, 1), (1, 1)),
        dimension_numbers=("NCHW", "OIHW", "NCHW"),
    )
    h = jnp.maximum(h + params["conv1_b"][None, :, None, None], 0.0)
    w = jnp.transpose(params["deconv_w"][:, :, ::-1, ::-1], (1, 0, 2, 3))
    y = jax.lax.conv_general_dilated(
        h, w, (1, 1), ((1, 2), (1, 2)), lhs_dilation=(2, 2),
        dimension_numbers=("NCHW", "OIHW", "NCHW"),
    )
    return jnp.maximum(y + params["deconv_b"][None, :, None, None], 0.0)


# ----------------------------------- main ----------------------------------- #
if __name__ == "__main__":
    key = jax.random.PRNGKey(0)
    k_x, k_w1, k_b1, k_w2, k_b2 = jax.random.split(key, 5)

    batch, in_ch, mid_ch, out_ch, H, W = 2, 4, 8, 4, 16, 16

    x = jax.random.normal(k_x, (batch, in_ch, H, W), jnp.float32)
    params = {
        # Conv2d(in_ch, mid_ch, 3, padding=1): weight (mid, in, 3, 3)
        "conv1_w": 0.1 * jax.random.normal(k_w1, (mid_ch, in_ch, 3, 3), jnp.float32),
        "conv1_b": 0.1 * jax.random.normal(k_b1, (mid_ch,), jnp.float32),
        # ConvTranspose2d(mid_ch, out_ch, 3, stride=2, padding=1, output_padding=1):
        # weight (mid, out, 3, 3)
        "deconv_w": 0.1 * jax.random.normal(k_w2, (mid_ch, out_ch, 3, 3), jnp.float32),
        "deconv_b": 0.1 * jax.random.normal(k_b2, (out_ch,), jnp.float32),
    }

    prep = prepare_params(params)              # one-time weight reformatting
    out = jax.block_until_ready(decoder_block(x, prep))
    ref = jax.block_until_ready(decoder_block_ref(x, params))

    assert out.shape == (batch, out_ch, 2 * H, 2 * W), out.shape
    assert jnp.allclose(out, ref, rtol=1e-3, atol=1e-3), float(
        jnp.max(jnp.abs(out - ref))
    )

    print("KERNEL_OK")
</pallas_src>

<mosaic_0001>
module attributes {stable_mosaic.version = 11 : i64} {
  func.func @_decoder_block_kernel(%arg0: i32, %arg1: memref<1x16x16x4xf32, #tpu.memory_space<vmem>>, %arg2: memref<36x8xf32, #tpu.memory_space<vmem>>, %arg3: memref<1x8xf32, #tpu.memory_space<vmem>>, %arg4: memref<32x16xf32, #tpu.memory_space<vmem>>, %arg5: memref<1x16xf32, #tpu.memory_space<vmem>>, %arg6: memref<1x16x256xf32, #tpu.memory_space<vmem>>, %arg7: memref<18x18x4xf32, #tpu.memory_space<vmem>>, %arg8: memref<17x17x8xf32, #tpu.memory_space<vmem>>) attributes {dimension_semantics = [#tpu.dimension_semantics<parallel>], iteration_bounds = array<i64: 2>, scalar_prefetch = 0 : i64, scratch_operands = 2 : i64, tpu.core_type = #tpu.core_type<tc>, window_params = [{transform_indices = @transform_0, window_bounds = array<i64: 1, 16, 16, 4>}, {pipeline_mode = #tpu.pipeline_mode<synchronous>, transform_indices = @transform_1, window_bounds = array<i64: 36, 8>}, {pipeline_mode = #tpu.pipeline_mode<synchronous>, transform_indices = @transform_2, window_bounds = array<i64: 1, 8>}, {pipeline_mode = #tpu.pipeline_mode<synchronous>, transform_indices = @transform_3, window_bounds = array<i64: 32, 16>}, {pipeline_mode = #tpu.pipeline_mode<synchronous>, transform_indices = @transform_4, window_bounds = array<i64: 1, 16>}, {transform_indices = @transform_5, window_bounds = array<i64: 1, 16, 256>}]} {
    %cst = arith.constant 0.000000e+00 : f32
    %0 = vector.broadcast %cst : f32 to vector<18x18x4xf32>
    %c0 = arith.constant 0 : index
    %c0_0 = arith.constant 0 : index
    %c0_1 = arith.constant 0 : index
    %1 = vector.load %arg7[%c0, %c0_0, %c0_1] : memref<18x18x4xf32, #tpu.memory_space<vmem>>, vector<18x18x4xf32>
    tpu.vector_store %arg7[%c0, %c0_0, %c0_1], %0 {strides = array<i32>} : memref<18x18x4xf32, #tpu.memory_space<vmem>>, vector<18x18x4xf32>,
    %c0_2 = arith.constant 0 : index
    %c0_3 = arith.constant 0 : index
    %c0_4 = arith.constant 0 : index
    %c0_5 = arith.constant 0 : index
    %2 = vector.load %arg1[%c0_2, %c0_3, %c0_4, %c0_5] : memref<1x16x16x4xf32, #tpu.memory_space<vmem>>, vector<1x16x16x4xf32>
    %3 = vector.shape_cast %2 : vector<1x16x16x4xf32> to vector<16x16x4xf32>
    %c1 = arith.constant 1 : index
    %c1_6 = arith.constant 1 : index
    %c0_7 = arith.constant 0 : index
    %4 = vector.load %arg7[%c1, %c1_6, %c0_7] : memref<18x18x4xf32, #tpu.memory_space<vmem>>, vector<16x16x4xf32>
    tpu.vector_store %arg7[%c1, %c1_6, %c0_7], %3 {strides = array<i32>} : memref<18x18x4xf32, #tpu.memory_space<vmem>>, vector<16x16x4xf32>,
    %c0_8 = arith.constant 0 : index
    %c0_9 = arith.constant 0 : index
    %c0_10 = arith.constant 0 : index
    %5 = vector.load %arg7[%c0_8, %c0_9, %c0_10] : memref<18x18x4xf32, #tpu.memory_space<vmem>>, vector<16x16x4xf32>
    %6 = vector.shape_cast %5 : vector<16x16x4xf32> to vector<256x4xf32>
    %c0_11 = arith.constant 0 : index
    %c1_12 = arith.constant 1 : index
    %c0_13 = arith.constant 0 : index
    %7 = vector.load %arg7[%c0_11, %c1_12, %c0_13] : memref<18x18x4xf32, #tpu.memory_space<vmem>>, vector<16x16x4xf32>
    %8 = vector.shape_cast %7 : vector<16x16x4xf32> to vector<256x4xf32>
    %c0_14 = arith.constant 0 : index
    %c2 = arith.constant 2 : index
    %c0_15 = arith.constant 0 : index
    %9 = vector.load %arg7[%c0_14, %c2, %c0_15] : memref<18x18x4xf32, #tpu.memory_space<vmem>>, vector<16x16x4xf32>
    %10 = vector.shape_cast %9 : vector<16x16x4xf32> to vector<256x4xf32>
    %c1_16 = arith.constant 1 : index
    %c0_17 = arith.constant 0 : index
    %c0_18 = arith.constant 0 : index
    %11 = vector.load %arg7[%c1_16, %c0_17, %c0_18] : memref<18x18x4xf32, #tpu.memory_space<vmem>>, vector<16x16x4xf32>
    %12 = vector.shape_cast %11 : vector<16x16x4xf32> to vector<256x4xf32>
    %c1_19 = arith.constant 1 : index
    %c1_20 = arith.constant 1 : index
    %c0_21 = arith.constant 0 : index
    %13 = vector.load %arg7[%c1_19, %c1_20, %c0_21] : memref<18x18x4xf32, #tpu.memory_space<vmem>>, vector<16x16x4xf32>
    %14 = vector.shape_cast %13 : vector<16x16x4xf32> to vector<256x4xf32>
    %c1_22 = arith.constant 1 : index
    %c2_23 = arith.constant 2 : index
    %c0_24 = arith.constant 0 : index
    %15 = vector.load %arg7[%c1_22, %c2_23, %c0_24] : memref<18x18x4xf32, #tpu.memory_space<vmem>>, vector<16x16x4xf32>
    %16 = vector.shape_cast %15 : vector<16x16x4xf32> to vector<256x4xf32>
    %c2_25 = arith.constant 2 : index
    %c0_26 = arith.constant 0 : index
    %c0_27 = arith.constant 0 : index
    %17 = vector.load %arg7[%c2_25, %c0_26, %c0_27] : memref<18x18x4xf32, #tpu.memory_space<vmem>>, vector<16x16x4xf32>
    %18 = vector.shape_cast %17 : vector<16x16x4xf32> to vector<256x4xf32>
    %c2_28 = arith.constant 2 : index
    %c1_29 = arith.constant 1 : index
    %c0_30 = arith.constant 0 : index
    %19 = vector.load %arg7[%c2_28, %c1_29, %c0_30] : memref<18x18x4xf32, #tpu.memory_space<vmem>>, vector<16x16x4xf32>
    %20 = vector.shape_cast %19 : vector<16x16x4xf32> to vector<256x4xf32>
    %c2_31 = arith.constant 2 : index
    %c2_32 = arith.constant 2 : index
    %c0_33 = arith.constant 0 : index
    %21 = vector.load %arg7[%c2_31, %c2_32, %c0_33] : memref<18x18x4xf32, #tpu.memory_space<vmem>>, vector<16x16x4xf32>
    %22 = vector.shape_cast %21 : vector<16x16x4xf32> to vector<256x4xf32>
    %23 = tpu.concatenate %6, %8, %10, %12, %14, %16, %18, %20, %22 in 1 : vector<256x4xf32>, vector<256x4xf32>, vector<256x4xf32>, vector<256x4xf32>, vector<256x4xf32>, vector<256x4xf32>, vector<256x4xf32>, vector<256x4xf32>, vector<256x4xf32> -> vector<256x36xf32>
    %c0_34 = arith.constant 0 : index
    %c0_35 = arith.constant 0 : index
    %24 = vector.load %arg2[%c0_34, %c0_35] : memref<36x8xf32, #tpu.memory_space<vmem>>, vector<36x8xf32>
    %cst_36 = arith.constant dense<0.000000e+00> : vector<256x8xf32>
    %25 = tpu.matmul %23, %24, %cst_36 {dimension_numbers = #tpu.dot_dimension_numbers<[1], [0], [0], [1], [0, 0, 1, 1], [], []>} : vector<256x36xf32>, vector<36x8xf32>, vector<256x8xf32> -> vector<256x8xf32>
    %c0_37 = arith.constant 0 : index
    %c0_38 = arith.constant 0 : index
    %26 = vector.load %arg3[%c0_37, %c0_38] : memref<1x8xf32, #tpu.memory_space<vmem>>, vector<1x8xf32>
    %27 = vector.broadcast %26 : vector<1x8xf32> to vector<256x8xf32>
    %28 = arith.addf %25, %27 : vector<256x8xf32>
    %cst_39 = arith.constant 0.000000e+00 : f32
    %29 = vector.broadcast %cst_39 : f32 to vector<256x8xf32>
    %30 = arith.maximumf %28, %29 : vector<256x8xf32>
    %cst_40 = arith.constant 0.000000e+00 : f32
    %31 = vector.broadcast %cst_40 : f32 to vector<17x17x8xf32>
    %c0_41 = arith.constant 0 : index
    %c0_42 = arith.constant 0 : index
    %c0_43 = arith.constant 0 : index
    %32 = vector.load %arg8[%c0_41, %c0_42, %c0_43] : memref<17x17x8xf32, #tpu.memory_space<vmem>>, vector<17x17x8xf32>
    tpu.vector_store %arg8[%c0_41, %c0_42, %c0_43], %31 {strides = array<i32>} : memref<17x17x8xf32, #tpu.memory_space<vmem>>, vector<17x17x8xf32>,
    %33 = vector.shape_cast %30 : vector<256x8xf32> to vector<16x16x8xf32>
    %c0_44 = arith.constant 0 : index
    %c0_45 = arith.constant 0 : index
    %c0_46 = arith.constant 0 : index
    %34 = vector.load %arg8[%c0_44, %c0_45, %c0_46] : memref<17x17x8xf32, #tpu.memory_space<vmem>>, vector<16x16x8xf32>
    tpu.vector_store %arg8[%c0_44, %c0_45, %c0_46], %33 {strides = array<i32>} : memref<17x17x8xf32, #tpu.memory_space<vmem>>, vector<16x16x8xf32>,
    %c0_47 = arith.constant 0 : index
    %c1_48 = arith.constant 1 : index
    %c0_49 = arith.constant 0 : index
    %35 = vector.load %arg8[%c0_47, %c1_48, %c0_49] : memref<17x17x8xf32, #tpu.memory_space<vmem>>, vector<16x16x8xf32>
    %36 = vector.shape_cast %35 : vector<16x16x8xf32> to vector<256x8xf32>
    %c1_50 = arith.constant 1 : index
    %c0_51 = arith.constant 0 : index
    %c0_52 = arith.constant 0 : index
    %37 = vector.load %arg8[%c1_50, %c0_51, %c0_52] : memref<17x17x8xf32, #tpu.memory_space<vmem>>, vector<16x16x8xf32>
    %38 = vector.shape_cast %37 : vector<16x16x8xf32> to vector<256x8xf32>
    %c1_53 = arith.constant 1 : index
    %c1_54 = arith.constant 1 : index
    %c0_55 = arith.constant 0 : index
    %39 = vector.load %arg8[%c1_53, %c1_54, %c0_55] : memref<17x17x8xf32, #tpu.memory_space<vmem>>, vector<16x16x8xf32>
    %40 = vector.shape_cast %39 : vector<16x16x8xf32> to vector<256x8xf32>
    %41 = tpu.concatenate %30, %36, %38, %40 in 1 : vector<256x8xf32>, vector<256x8xf32>, vector<256x8xf32>, vector<256x8xf32> -> vector<256x32xf32>
    %c0_56 = arith.constant 0 : index
    %c0_57 = arith.constant 0 : index
    %42 = vector.load %arg4[%c0_56, %c0_57] : memref<32x16xf32, #tpu.memory_space<vmem>>, vector<32x16xf32>
    %cst_58 = arith.constant dense<0.000000e+00> : vector<256x16xf32>
    %43 = tpu.matmul %41, %42, %cst_58 {dimension_numbers = #tpu.dot_dimension_numbers<[1], [0], [0], [1], [0, 0, 1, 1], [], []>} : vector<256x32xf32>, vector<32x16xf32>, vector<256x16xf32> -> vector<256x16xf32>
    %c0_59 = arith.constant 0 : index
    %c0_60 = arith.constant 0 : index
    %44 = vector.load %arg5[%c0_59, %c0_60] : memref<1x16xf32, #tpu.memory_space<vmem>>, vector<1x16xf32>
    %45 = vector.broadcast %44 : vector<1x16xf32> to vector<256x16xf32>
    %46 = arith.addf %43, %45 : vector<256x16xf32>
    %cst_61 = arith.constant 0.000000e+00 : f32
    %47 = vector.broadcast %cst_61 : f32 to vector<256x16xf32>
    %48 = arith.maximumf %46, %47 : vector<256x16xf32>
    %49 = tpu.transpose %48, [1, 0] : vector<256x16xf32> -> vector<16x256xf32>
    %c0_62 = arith.constant 0 : index
    %c0_63 = arith.constant 0 : index
    %c0_64 = arith.constant 0 : index
    %50 = vector.load %arg6[%c0_62, %c0_63, %c0_64] : memref<1x16x256xf32, #tpu.memory_space<vmem>>, vector<1x16x256xf32>
    %51 = vector.shape_cast %50 : vector<1x16x256xf32> to vector<16x256xf32>
    %52 = vector.shape_cast %49 : vector<16x256xf32> to vector<1x16x256xf32>
    tpu.vector_store %arg6[%c0_62, %c0_63, %c0_64], %52 {strides = array<i32>} : memref<1x16x256xf32, #tpu.memory_space<vmem>>, vector<1x16x256xf32>,
    return
  }
  func.func @transform_0(%arg0: i32) -> (i32, i32, i32, i32) {
    %c0_i32 = arith.constant 0 : i32
    %c0_i32_0 = arith.constant 0 : i32
    %c0_i32_1 = arith.constant 0 : i32
    %c0_i32_2 = arith.constant 0 : i32
    return %arg0, %c0_i32, %c0_i32_0, %c0_i32_1 : i32, i32, i32, i32
  }
  func.func @transform_1(%arg0: i32) -> (i32, i32) {
    %c0_i32 = arith.constant 0 : i32
    %c0_i32_0 = arith.constant 0 : i32
    %c0_i32_1 = arith.constant 0 : i32
    return %c0_i32, %c0_i32_0 : i32, i32
  }
  func.func @transform_2(%arg0: i32) -> (i32, i32) {
    %c0_i32 = arith.constant 0 : i32
    %c0_i32_0 = arith.constant 0 : i32
    %c0_i32_1 = arith.constant 0 : i32
    return %c0_i32, %c0_i32_0 : i32, i32
  }
  func.func @transform_3(%arg0: i32) -> (i32, i32) {
    %c0_i32 = arith.constant 0 : i32
    %c0_i32_0 = arith.constant 0 : i32
    %c0_i32_1 = arith.constant 0 : i32
    return %c0_i32, %c0_i32_0 : i32, i32
  }
  func.func @transform_4(%arg0: i32) -> (i32, i32) {
    %c0_i32 = arith.constant 0 : i32
    %c0_i32_0 = arith.constant 0 : i32
    %c0_i32_1 = arith.constant 0 : i32
    return %c0_i32, %c0_i32_0 : i32, i32
  }
  func.func @transform_5(%arg0: i32) -> (i32, i32, i32) {
    %c0_i32 = arith.constant 0 : i32
    %c0_i32_0 = arith.constant 0 : i32
    %c0_i32_1 = arith.constant 0 : i32
    return %arg0, %c0_i32, %c0_i32_0 : i32, i32, i32
  }
}

</mosaic_0001>

<llo_original>
// kernel: decoder_block.1
$region0: #{decoder_block.1}
  #allocation0 [shape = 'u32[]', space=smem, size = 0x4, offset = 0x4, fixed_abs, tag = 'smem constant byte address 0x4 - core index']
  #allocation1 [shape = 'u32[72,128]{1,0:T(1,128)}', space=vmem, size = 0x9000, scoped, tag = 'internal scratch']
  #allocation2 [shape = 'f32[18,18,4]{2,1,0:T(8,128)}', space=vmem, size = 0x36000, scoped, tag = 'scratch operand']
  #allocation3 [shape = 'f32[17,17,8]{2,1,0:T(8,128)}', space=vmem, size = 0x33000, scoped, tag = 'scratch operand']
  %s0 = inlined_call_operand.vmem [shape: f32[2,16,16,4], index: 0, kind: input, shape index: {}]
  %s1 = inlined_call_operand.vmem [shape: f32[36,8], index: 1, kind: input, shape index: {}]
  %s2 = inlined_call_operand.vmem [shape: f32[1,8], index: 2, kind: input, shape index: {}]
  %s3 = inlined_call_operand.vmem [shape: f32[32,16], index: 3, kind: input, shape index: {}]
  %s4 = inlined_call_operand.vmem [shape: f32[1,16], index: 4, kind: input, shape index: {}]
  %s5 = inlined_call_operand.vmem [shape: f32[2,16,256], index: 5, kind: output, shape index: {}]
  %s6 = sld [smem:[#allocation0]]
  $region53: #{decoder_block.1} parent=0
    _
  %s8 = ssub.s32 1, %s6
  %s9 = scalar_select 0, %s8, %s6
  loop: start=0, step=1, limit=4
  $region2: #{decoder_block.1} parent=0 // loop_pre_header
    _
  $region3: #{decoder_block.1} parent=0 // loop_header
    %s11 = sphi 0, %s15
    %p12 = scmp.ge.s32.totalorder %s11, 4
    %s21 = sphi 0, %s23
    %s24 = sphi 0, %s21
    %s25 = sphi 0, %s24
    %s41 = sphi 0, %s25
    %s45 = sphi 0, %s45
    %s47 = sphi 0, %s45
    %s48 = sphi 0, %s47
    %s62 = sphi 0, %s48
    %s66 = sphi 0, %s66
    %s68 = sphi 0, %s66
    %s69 = sphi 0, %s68
    %s83 = sphi 0, %s69
    %s87 = sphi 0, %s87
    %s89 = sphi 0, %s87
    %s90 = sphi 0, %s89
    %s104 = sphi 0, %s90
    %s108 = sphi 0, %s108
    %s110 = sphi 0, %s108
    %s111 = sphi 0, %s110
    %s125 = sphi 0, %s111
    %s131 = sphi 0, %s133
    %s134 = sphi 0, %s131
    %s135 = sphi 0, %s134
    %s151 = sphi 0, %s135
  $region4: #{decoder_block.1} parent=0 // loop_header_branch
    %14 = sbr.rel (%p12) target = $region8
  $region5: #{decoder_block.1} parent=0 // loop_body
    %s16 = ssub.s32 %s11, 1
    %s17 = ssub.s32 %s11, 2
    %s18 = sadd.s32 %s11, 1
    %s19 = ssub.s32 %s11, %s18
    %p20 = scmp.eq.s32.totalorder %s19, 0
    %s22 = sadd.s32 %s21, 1
    %s23 = scalar_select %p20, %s21, %s22
    %p26 = pneg %p20
    %p27 = scmp.eq.s32.totalorder %s11, 1
    %p28 = por %p26, %p27
    %p29 = scmp.ne.s32.totalorder %s21, %s24
    %p30 = scmp.eq.s32.totalorder %s11, 0
    %p31 = por %p29, %p30
    %p32 = scmp.ne.s32.totalorder %s21, %s24
    %p33 = scmp.eq.s32.totalorder %s16, 1
    %p34 = por %p32, %p33
    %p35 = scmp.ne.s32.totalorder %s24, %s25
    %p36 = scmp.eq.s32.totalorder %s16, 0
    %p37 = por %p35, %p36
    %p38 = scmp.ne.s32.totalorder %s24, %s25
    %p39 = scmp.eq.s32.totalorder %s17, 1
    %p40 = por %p38, %p39
    %p42 = scmp.ne.s32.totalorder %s25, %s41
    %p43 = scmp.eq.s32.totalorder %s17, 0
    %p44 = por %p42, %p43
    %s46 = sadd.s32 %s45, 1
    %p49 = scmp.eq.s32.totalorder %s11, 1
    %p50 = scmp.ne.s32.totalorder %s45, %s47
    %p51 = scmp.eq.s32.totalorder %s11, 0
    %p52 = por %p50, %p51
    %p53 = scmp.ne.s32.totalorder %s45, %s47
    %p54 = scmp.eq.s32.totalorder %s16, 1
    %p55 = por %p53, %p54
    %p56 = scmp.ne.s32.totalorder %s47, %s48
    %p57 = scmp.eq.s32.totalorder %s16, 0
    %p58 = por %p56, %p57
    %p59 = scmp.ne.s32.totalorder %s47, %s48
    %p60 = scmp.eq.s32.totalorder %s17, 1
    %p61 = por %p59, %p60
    %p63 = scmp.ne.s32.totalorder %s48, %s62
    %p64 = scmp.eq.s32.totalorder %s17, 0
    %p65 = por %p63, %p64
    %s67 = sadd.s32 %s66, 1
    %p70 = scmp.eq.s32.totalorder %s11, 1
    %p71 = scmp.ne.s32.totalorder %s66, %s68
    %p72 = scmp.eq.s32.totalorder %s11, 0
    %p73 = por %p71, %p72
    %p74 = scmp.ne.s32.totalorder %s66, %s68
    %p75 = scmp.eq.s32.totalorder %s16, 1
    %p76 = por %p74, %p75
    %p77 = scmp.ne.s32.totalorder %s68, %s69
    %p78 = scmp.eq.s32.totalorder %s16, 0
    %p79 = por %p77, %p78
    %p80 = scmp.ne.s32.totalorder %s68, %s69
    %p81 = scmp.eq.s32.totalorder %s17, 1
    %p82 = por %p80, %p81
    %p84 = scmp.ne.s32.totalorder %s69, %s83
    %p85 = scmp.eq.s32.totalorder %s17, 0
    %p86 = por %p84, %p85
    %s88 = sadd.s32 %s87, 1
    %p91 = scmp.eq.s32.totalorder %s11, 1
    %p92 = scmp.ne.s32.totalorder %s87, %s89
    %p93 = scmp.eq.s32.totalorder %s11, 0
    %p94 = por %p92, %p93
    %p95 = scmp.ne.s32.totalorder %s87, %s89
    %p96 = scmp.eq.s32.totalorder %s16, 1
    %p97 = por %p95, %p96
    %p98 = scmp.ne.s32.totalorder %s89, %s90
    %p99 = scmp.eq.s32.totalorder %s16, 0
    %p100 = por %p98, %p99
    %p101 = scmp.ne.s32.totalorder %s89, %s90
    %p102 = scmp.eq.s32.totalorder %s17, 1
    %p103 = por %p101, %p102
    %p105 = scmp.ne.s32.totalorder %s90, %s104
    %p106 = scmp.eq.s32.totalorder %s17, 0
    %p107 = por %p105, %p106
    %s109 = sadd.s32 %s108, 1
    %p112 = scmp.eq.s32.totalorder %s11, 1
    %p113 = scmp.ne.s32.totalorder %s108, %s110
    %p114 = scmp.eq.s32.totalorder %s11, 0
    %p115 = por %p113, %p114
    %p116 = scmp.ne.s32.totalorder %s108, %s110
    %p117 = scmp.eq.s32.totalorder %s16, 1
    %p118 = por %p116, %p117
    %p119 = scmp.ne.s32.totalorder %s110, %s111
    %p120 = scmp.eq.s32.totalorder %s16, 0
    %p121 = por %p119, %p120
    %p122 = scmp.ne.s32.totalorder %s110, %s111
    %p123 = scmp.eq.s32.totalorder %s17, 1
    %p124 = por %p122, %p123
    %p126 = scmp.ne.s32.totalorder %s111, %s125
    %p127 = scmp.eq.s32.totalorder %s17, 0
    %p128 = por %p126, %p127
    %s129 = ssub.s32 %s11, %s18
    %p130 = scmp.eq.s32.totalorder %s129, 0
    %s132 = sadd.s32 %s131, 1
    %s133 = scalar_select %p130, %s131, %s132
    %p136 = pneg %p130
    %p137 = scmp.eq.s32.totalorder %s11, 1
    %p138 = por %p136, %p137
    %p139 = scmp.ne.s32.totalorder %s131, %s134
    %p140 = scmp.eq.s32.totalorder %s11, 0
    %p141 = por %p139, %p140
    %p142 = scmp.ne.s32.totalorder %s131, %s134
    %p143 = scmp.eq.s32.totalorder %s16, 1
    %p144 = por %p142, %p143
    %p145 = scmp.ne.s32.totalorder %s134, %s135
    %p146 = scmp.eq.s32.totalorder %s16, 0
    %p147 = por %p145, %p146
    %p148 = scmp.ne.s32.totalorder %s134, %s135
    %p149 = scmp.eq.s32.totalorder %s17, 1
    %p150 = por %p148, %p149
    %p152 = scmp.ne.s32.totalorder %s135, %s151
    %p153 = scmp.eq.s32.totalorder %s17, 0
    %p154 = por %p152, %p153
    %p155 = scmp.le.s32.totalorder 1, %s11
    %p156 = scmp.lt.s32.totalorder %s11, 3
    %p157 = pnand %p155, %p156
    %p158 = pneg %p157
    // Predicated region
    $region9: #{decoder_block.1} parent=5 // pred_check
      _
    $region10: #{decoder_block.1} parent=5 // pred_check_branch
      %160 = sbr.rel (%p157) target = $region12
    $region11: #{decoder_block.1} parent=5 // pred_region
      %s161 = ssub.s32 %s11, 1
      // Predicated region
      $region13: #{decoder_block.1} parent=11 // pred_check
        %p162 = pneg %p58
      $region14: #{decoder_block.1} parent=11 // pred_check_branch
        %164 = sbr.rel (%p162) target = $region16
      $region15: #{decoder_block.1} parent=11 // pred_region
        _
      $region16: #{decoder_block.1} parent=11 // pred_fallthru
        _
      // Predicated region
      $region17: #{decoder_block.1} parent=11 // pred_check
        %p165 = pneg %p79
      $region18: #{decoder_block.1} parent=11 // pred_check_branch
        %167 = sbr.rel (%p165) target = $region20
      $region19: #{decoder_block.1} parent=11 // pred_region
        _
      $region20: #{decoder_block.1} parent=11 // pred_fallthru
        _
      // Predicated region
      $region21: #{decoder_block.1} parent=11 // pred_check
        %p168 = pneg %p100
      $region22: #{decoder_block.1} parent=11 // pred_check_branch
        %170 = sbr.rel (%p168) target = $region24
      $region23: #{decoder_block.1} parent=11 // pred_region
        _
      $region24: #{decoder_block.1} parent=11 // pred_fallthru
        _
      // Predicated region
      $region25: #{decoder_block.1} parent=11 // pred_check
        %p171 = pneg %p121
      $region26: #{decoder_block.1} parent=11 // pred_check_branch
        %173 = sbr.rel (%p171) target = $region28
      $region27: #{decoder_block.1} parent=11 // pred_region
        _
      $region28: #{decoder_block.1} parent=11 // pred_fallthru
        _
    $region12: #{decoder_block.1} parent=5 // pred_fallthru
      _
    %p174 = scmp.lt.s32.totalorder %s11, 2
    // Predicated region
    $region29: #{decoder_block.1} parent=5 // pred_check
      %p175 = pneg %p174
    $region30: #{decoder_block.1} parent=5 // pred_check_branch
      %177 = sbr.rel (%p175) target = $region32
    $region31: #{decoder_block.1} parent=5 // pred_region
      // Predicated region
      $region33: #{decoder_block.1} parent=31 // pred_check
        %p178 = pneg %p31
      $region34: #{decoder_block.1} parent=31 // pred_check_branch
        %180 = sbr.rel (%p178) target = $region36
      $region35: #{decoder_block.1} parent=31 // pred_region
        %p181 = scmp.lt.s32.totalorder %s11, 1
        %s182 = scalar_select %p181, %s11, 1
        %s183 = smul.addr %s182, 32
        %s184 = smul.addr %s183, 8
        %s185 = scalar_lea.vmem %s0, %s184
      $region36: #{decoder_block.1} parent=31 // pred_fallthru
        _
    $region32: #{decoder_block.1} parent=5 // pred_fallthru
      _
    %p186 = scmp.le.s32.totalorder 1, %s11
    %p187 = scmp.lt.s32.totalorder %s11, 3
    %p188 = pnand %p186, %p187
    %p189 = pneg %p188
    // Predicated region
    $region37: #{decoder_block.1} parent=5 // pred_check
      _
    $region38: #{decoder_block.1} parent=5 // pred_check_branch
      %191 = sbr.rel (%p188) target = $region40
    $region39: #{decoder_block.1} parent=5 // pred_region
      %s192 = ssub.s32 %s11, 1
      %p193 = scmp.lt.s32.totalorder %s16, 1
      %s194 = scalar_select %p193, %s16, 1
      %s195 = smul.addr %s194, 32
      %s196 = smul.addr %s195, 8
      %s197 = scalar_lea.vmem %s0, %s196
      %p198 = pneg %p37
      %p199 = pneg %p34
      %p200 = pneg %p58
      %p201 = pneg %p55
      %p202 = pneg %p79
      %p203 = pneg %p76
      %p204 = pneg %p100
      %p205 = pneg %p97
      %p206 = pneg %p121
      %p207 = pneg %p118
      %p208 = pneg %p147
      %p209 = pneg %p144
      %p210 = scmp.lt.s32.totalorder %s16, 1
      %s211 = scalar_select %p210, %s16, 1
      %s212 = smul.addr %s211, 4
      %s213 = smul.addr %s212, 8
      %s214 = scalar_lea.vmem %s5, %s213
      %p215 = scmp.lt.s32.totalorder %s16, 1
      %s216 = scalar_select %p215, %s16, 1
      %s217 = smul.addr %s216, 32
      %s218 = smul.addr %s217, 8
      %s219 = scalar_lea.vmem %s0, %s218
      %p220 = scmp.lt.s32.totalorder %s16, 1
      %s221 = scalar_select %p220, %s16, 1
      %s222 = smul.addr %s221, 4
      %s223 = smul.addr %s222, 8
      %s224 = scalar_lea.vmem %s5, %s223
      %vm225 = vcmask 31744
      %226 = vst.msk [vmem:[#allocation2] sm:$0xff] %vm225, 0.0
      %227 = vst.msk [vmem:[#allocation2 + $0x8] sm:$0xff] %vm225, 0.0
      %vm228 = vcmask 25600
      %229 = vst.msk [vmem:[#allocation2 + $0x10] sm:$0x3] %vm228, 0.0
      %230 = vst.msk [vmem:[#allocation2 + $0x18] sm:$0xff] %vm225, 0.0
      %231 = vst.msk [vmem:[#allocation2 + $0x20] sm:$0xff] %vm225, 0.0
      %232 = vst.msk [vmem:[#allocation2 + $0x28] sm:$0x3] %vm228, 0.0
      %233 = vst.msk [vmem:[#allocation2 + $0x30] sm:$0xff] %vm225, 0.0
      %234 = vst.msk [vmem:[#allocation2 + $0x38] sm:$0xff] %vm225, 0.0
      %235 = vst.msk [vmem:[#allocation2 + $0x40] sm:$0x3] %vm228, 0.0
      %236 = vst.msk [vmem:[#allocation2 + $0x48] sm:$0xff] %vm225, 0.0
      %237 = vst.msk [vmem:[#allocation2 + $0x50] sm:$0xff] %vm225, 0.0
      %238 = vst.msk [vmem:[#allocation2 + $0x58] sm:$0x3] %vm228, 0.0
      %239 = vst.msk [vmem:[#allocation2 + $0x60] sm:$0xff] %vm225, 0.0
      %240 = vst.msk [vmem:[#allocation2 + $0x68] sm:$0xff] %vm225, 0.0
      %241 = vst.msk [vmem:[#allocation2 + $0x70] sm:$0x3] %vm228, 0.0
      %242 = vst.msk [vmem:[#allocation2 + $0x78] sm:$0xff] %vm225, 0.0
      %243 = vst.msk [vmem:[#allocation2 + $0x80] sm:$0xff] %vm225, 0.0
      %244 = vst.msk [vmem:[#allocation2 + $0x88] sm:$0x3] %vm228, 0.0
      %245 = vst.msk [vmem:[#allocation2 + $0x90] sm:$0xff] %vm225, 0.0
      %246 = vst.msk [vmem:[#allocation2 + $0x98] sm:$0xff] %vm225, 0.0
      %247 = vst.msk [vmem:[#allocation2 + $0xa0] sm:$0x3] %vm228, 0.0
      %248 = vst.msk [vmem:[#allocation2 + $0xa8] sm:$0xff] %vm225, 0.0
      %249 = vst.msk [vmem:[#allocation2 + $0xb0] sm:$0xff] %vm225, 0.0
      %250 = vst.msk [vmem:[#allocation2 + $0xb8] sm:$0x3] %vm228, 0.0
      %251 = vst.msk [vmem:[#allocation2 + $0xc0] sm:$0xff] %vm225, 0.0
      %252 = vst.msk [vmem:[#allocation2 + $0xc8] sm:$0xff] %vm225, 0.0
      %253 = vst.msk [vmem:[#allocation2 + $0xd0] sm:$0x3] %vm228, 0.0
      %254 = vst.msk [vmem:[#allocation2 + $0xd8] sm:$0xff] %vm225, 0.0
      %255 = vst.msk [vmem:[#allocation2 + $0xe0] sm:$0xff] %vm225, 0.0
      %256 = vst.msk [vmem:[#allocation2 + $0xe8] sm:$0x3] %vm228, 0.0
      %257 = vst.msk [vmem:[#allocation2 + $0xf0] sm:$0xff] %vm225, 0.0
      %258 = vst.msk [vmem:[#allocation2 + $0xf8] sm:$0xff] %vm225, 0.0
      %259 = vst.msk [vmem:[#allocation2 + $0x100] sm:$0x3] %vm228, 0.0
      %260 = vst.msk [vmem:[#allocation2 + $0x108] sm:$0xff] %vm225, 0.0
      %261 = vst.msk [vmem:[#allocation2 + $0x110] sm:$0xff] %vm225, 0.0
      %262 = vst.msk [vmem:[#allocation2 + $0x118] sm:$0x3] %vm228, 0.0
      %263 = vst.msk [vmem:[#allocation2 + $0x120] sm:$0xff] %vm225, 0.0
      %264 = vst.msk [vmem:[#allocation2 + $0x128] sm:$0xff] %vm225, 0.0
      %265 = vst.msk [vmem:[#allocation2 + $0x130] sm:$0x3] %vm228, 0.0
      %266 = vst.msk [vmem:[#allocation2 + $0x138] sm:$0xff] %vm225, 0.0
      %267 = vst.msk [vmem:[#allocation2 + $0x140] sm:$0xff] %vm225, 0.0
      %268 = vst.msk [vmem:[#allocation2 + $0x148] sm:$0x3] %vm228, 0.0
      %269 = vst.msk [vmem:[#allocation2 + $0x150] sm:$0xff] %vm225, 0.0
      %270 = vst.msk [vmem:[#allocation2 + $0x158] sm:$0xff] %vm225, 0.0
      %271 = vst.msk [vmem:[#allocation2 + $0x160] sm:$0x3] %vm228, 0.0
      %272 = vst.msk [vmem:[#allocation2 + $0x168] sm:$0xff] %vm225, 0.0
      %273 = vst.msk [vmem:[#allocation2 + $0x170] sm:$0xff] %vm225, 0.0
      %274 = vst.msk [vmem:[#allocation2 + $0x178] sm:$0x3] %vm228, 0.0
      %275 = vst.msk [vmem:[#allocation2 + $0x180] sm:$0xff] %vm225, 0.0
      %276 = vst.msk [vmem:[#allocation2 + $0x188] sm:$0xff] %vm225, 0.0
      %277 = vst.msk [vmem:[#allocation2 + $0x190] sm:$0x3] %vm228, 0.0
      %278 = vst.msk [vmem:[#allocation2 + $0x198] sm:$0xff] %vm225, 0.0
      %279 = vst.msk [vmem:[#allocation2 + $0x1a0] sm:$0xff] %vm225, 0.0
      %280 = vst.msk [vmem:[#allocation2 + $0x1a8] sm:$0x3] %vm228, 0.0
      %v281 = vld [vmem:[%s219] sm:$0xff]
      %v282 = vld [vmem:[%s219 + $0x8] sm:$0xff]
      %v283 = vld [vmem:[%s219 + $0x10] sm:$0xff]
      %v284 = vld [vmem:[%s219 + $0x18] sm:$0xff]
      %v285 = vld [vmem:[%s219 + $0x20] sm:$0xff]
      %v286 = vld [vmem:[%s219 + $0x28] sm:$0xff]
      %v287 = vld [vmem:[%s219 + $0x30] sm:$0xff]
      %v288 = vld [vmem:[%s219 + $0x38] sm:$0xff]
      %v289 = vld [vmem:[%s219 + $0x40] sm:$0xff]
      %v290 = vld [vmem:[%s219 + $0x48] sm:$0xff]
      %v291 = vld [vmem:[%s219 + $0x50] sm:$0xff]
      %v292 = vld [vmem:[%s219 + $0x58] sm:$0xff]
      %v293 = vld [vmem:[%s219 + $0x60] sm:$0xff]
      %v294 = vld [vmem:[%s219 + $0x68] sm:$0xff]
      %v295 = vld [vmem:[%s219 + $0x70] sm:$0xff]
      %v296 = vld [vmem:[%s219 + $0x78] sm:$0xff]
      %v297 = vld [vmem:[%s219 + $0x80] sm:$0xff]
      %v298 = vld [vmem:[%s219 + $0x88] sm:$0xff]
      %v299 = vld [vmem:[%s219 + $0x90] sm:$0xff]
      %v300 = vld [vmem:[%s219 + $0x98] sm:$0xff]
      %v301 = vld [vmem:[%s219 + $0xa0] sm:$0xff]
      %v302 = vld [vmem:[%s219 + $0xa8] sm:$0xff]
      %v303 = vld [vmem:[%s219 + $0xb0] sm:$0xff]
      %v304 = vld [vmem:[%s219 + $0xb8] sm:$0xff]
      %v305 = vld [vmem:[%s219 + $0xc0] sm:$0xff]
      %v306 = vld [vmem:[%s219 + $0xc8] sm:$0xff]
      %v307 = vld [vmem:[%s219 + $0xd0] sm:$0xff]
      %v308 = vld [vmem:[%s219 + $0xd8] sm:$0xff]
      %v309 = vld [vmem:[%s219 + $0xe0] sm:$0xff]
      %v310 = vld [vmem:[%s219 + $0xe8] sm:$0xff]
      %v311 = vld [vmem:[%s219 + $0xf0] sm:$0xff]
      %v312 = vld [vmem:[%s219 + $0xf8] sm:$0xff]
      %s313 = scalar_lea.vmem [#allocation2], 24
      %314 = vst.msk [vmem:[%s313 + $0x1] sm:$0xff] %vm225, %v281
      %315 = vst.msk [vmem:[%s313 + $0x9] sm:$0xff] %vm225, %v282
      %316 = vst.msk [vmem:[%s313 + $0x19] sm:$0xff] %vm225, %v283
      %317 = vst.msk [vmem:[%s313 + $0x21] sm:$0xff] %vm225, %v284
      %318 = vst.msk [vmem:[%s313 + $0x31] sm:$0xff] %vm225, %v285
      %319 = vst.msk [vmem:[%s313 + $0x39] sm:$0xff] %vm225, %v286
      %320 = vst.msk [vmem:[%s313 + $0x49] sm:$0xff] %vm225, %v287
      %321 = vst.msk [vmem:[%s313 + $0x51] sm:$0xff] %vm225, %v288
      %322 = vst.msk [vmem:[%s313 + $0x61] sm:$0xff] %vm225, %v289
      %323 = vst.msk [vmem:[%s313 + $0x69] sm:$0xff] %vm225, %v290
      %324 = vst.msk [vmem:[%s313 + $0x79] sm:$0xff] %vm225, %v291
      %325 = vst.msk [vmem:[%s313 + $0x81] sm:$0xff] %vm225, %v292
      %326 = vst.msk [vmem:[%s313 + $0x91] sm:$0xff] %vm225, %v293
      %327 = vst.msk [vmem:[%s313 + $0x99] sm:$0xff] %vm225, %v294
      %328 = vst.msk [vmem:[%s313 + $0xa9] sm:$0xff] %vm225, %v295
      %329 = vst.msk [vmem:[%s313 + $0xb1] sm:$0xff] %vm225, %v296
      %330 = vst.msk [vmem:[%s313 + $0xc1] sm:$0xff] %vm225, %v297
      %331 = vst.msk [vmem:[%s313 + $0xc9] sm:$0xff] %vm225, %v298
      %332 = vst.msk [vmem:[%s313 + $0xd9] sm:$0xff] %vm225, %v299
      %333 = vst.msk [vmem:[%s313 + $0xe1] sm:$0xff] %vm225, %v300
      %334 = vst.msk [vmem:[%s313 + $0xf1] sm:$0xff] %vm225, %v301
      %335 = vst.msk [vmem:[%s313 + $0xf9] sm:$0xff] %vm225, %v302
      %336 = vst.msk [vmem:[%s313 + $0x109] sm:$0xff] %vm225, %v303
      %337 = vst.msk [vmem:[%s313 + $0x111] sm:$0xff] %vm225, %v304
      %338 = vst.msk [vmem:[%s313 + $0x121] sm:$0xff] %vm225, %v305
      %339 = vst.msk [vmem:[%s313 + $0x129] sm:$0xff] %vm225, %v306
      %340 = vst.msk [vmem:[%s313 + $0x139] sm:$0xff] %vm225, %v307
      %341 = vst.msk [vmem:[%s313 + $0x141] sm:$0xff] %vm225, %v308
      %342 = vst.msk [vmem:[%s313 + $0x151] sm:$0xff] %vm225, %v309
      %343 = vst.msk [vmem:[%s313 + $0x159] sm:$0xff] %vm225, %v310
      %344 = vst.msk [vmem:[%s313 + $0x169] sm:$0xff] %vm225, %v311
      %345 = vst.msk [vmem:[%s313 + $0x171] sm:$0xff] %vm225, %v312
      %v346 = vld [vmem:[#allocation2] sm:$0xff]
      %v347 = vld [vmem:[#allocation2 + $0x8] sm:$0xff]
      %v348 = vld [vmem:[#allocation2 + $0x18] sm:$0xff]
      %v349 = vld [vmem:[#allocation2 + $0x20] sm:$0xff]
      %v350 = vld [vmem:[#allocation2 + $0x30] sm:$0xff]
      %v351 = vld [vmem:[#allocation2 + $0x38] sm:$0xff]
      %v352 = vld [vmem:[#allocation2 + $0x48] sm:$0xff]
      %v353 = vld [vmem:[#allocation2 + $0x50] sm:$0xff]
      %v354 = vld [vmem:[#allocation2 + $0x60] sm:$0xff]
      %v355 = vld [vmem:[#allocation2 + $0x68] sm:$0xff]
      %v356 = vld [vmem:[#allocation2 + $0x78] sm:$0xff]
      %v357 = vld [vmem:[#allocation2 + $0x80] sm:$0xff]
      %v358 = vld [vmem:[#allocation2 + $0x90] sm:$0xff]
      %v359 = vld [vmem:[#allocation2 + $0x98] sm:$0xff]
      %v360 = vld [vmem:[#allocation2 + $0xa8] sm:$0xff]
      %v361 = vld [vmem:[#allocation2 + $0xb0] sm:$0xff]
      %v362 = vld [vmem:[#allocation2 + $0xc0] sm:$0xff]
      %v363 = vld [vmem:[#allocation2 + $0xc8] sm:$0xff]
      %v364 = vld [vmem:[#allocation2 + $0xd8] sm:$0xff]
      %v365 = vld [vmem:[#allocation2 + $0xe0] sm:$0xff]
      %v366 = vld [vmem:[#allocation2 + $0xf0] sm:$0xff]
      %v367 = vld [vmem:[#allocation2 + $0xf8] sm:$0xff]
      %v368 = vld [vmem:[#allocation2 + $0x108] sm:$0xff]
      %v369 = vld [vmem:[#allocation2 + $0x110] sm:$0xff]
      %v370 = vld [vmem:[#allocation2 + $0x120] sm:$0xff]
      %v371 = vld [vmem:[#allocation2 + $0x128] sm:$0xff]
      %v372 = vld [vmem:[#allocation2 + $0x138] sm:$0xff]
      %v373 = vld [vmem:[#allocation2 + $0x140] sm:$0xff]
      %v374 = vld [vmem:[#allocation2 + $0x150] sm:$0xff]
      %v375 = vld [vmem:[#allocation2 + $0x158] sm:$0xff]
      %v376 = vld [vmem:[#allocation2 + $0x168] sm:$0xff]
      %v377 = vld [vmem:[#allocation2 + $0x170] sm:$0xff]
      %v378 = vld [vmem:[#allocation2 + $0x1] sm:$0xff]
      %v379 = vld [vmem:[#allocation2 + $0x9] sm:$0xff]
      %v380 = vld [vmem:[#allocation2 + $0x19] sm:$0xff]
      %v381 = vld [vmem:[#allocation2 + $0x21] sm:$0xff]
      %v382 = vld [vmem:[#allocation2 + $0x31] sm:$0xff]
      %v383 = vld [vmem:[#allocation2 + $0x39] sm:$0xff]
      %v384 = vld [vmem:[#allocation2 + $0x49] sm:$0xff]
      %v385 = vld [vmem:[#allocation2 + $0x51] sm:$0xff]
      %v386 = vld [vmem:[#allocation2 + $0x61] sm:$0xff]
      %v387 = vld [vmem:[#allocation2 + $0x69] sm:$0xff]
      %v388 = vld [vmem:[#allocation2 + $0x79] sm:$0xff]
      %v389 = vld [vmem:[#allocation2 + $0x81] sm:$0xff]
      %v390 = vld [vmem:[#allocation2 + $0x91] sm:$0xff]
      %v391 = vld [vmem:[#allocation2 + $0x99] sm:$0xff]
      %v392 = vld [vmem:[#allocation2 + $0xa9] sm:$0xff]
      %v393 = vld [vmem:[#allocation2 + $0xb1] sm:$0xff]
      %v394 = vld [vmem:[#allocation2 + $0xc1] sm:$0xff]
      %v395 = vld [vmem:[#allocation2 + $0xc9] sm:$0xff]
      %v396 = vld [vmem:[#allocation2 + $0xd9] sm:$0xff]
      %v397 = vld [vmem:[#allocation2 + $0xe1] sm:$0xff]
      %v398 = vld [vmem:[#allocation2 + $0xf1] sm:$0xff]
      %v399 = vld [vmem:[#allocation2 + $0xf9] sm:$0xff]
      %v400 = vld [vmem:[#allocation2 + $0x109] sm:$0xff]
      %v401 = vld [vmem:[#allocation2 + $0x111] sm:$0xff]
      %v402 = vld [vmem:[#allocation2 + $0x121] sm:$0xff]
      %v403 = vld [vmem:[#allocation2 + $0x129] sm:$0xff]
      %v404 = vld [vmem:[#allocation2 + $0x139] sm:$0xff]
      %v405 = vld [vmem:[#allocation2 + $0x141] sm:$0xff]
      %v406 = vld [vmem:[#allocation2 + $0x151] sm:$0xff]
      %v407 = vld [vmem:[#allocation2 + $0x159] sm:$0xff]
      %v408 = vld [vmem:[#allocation2 + $0x169] sm:$0xff]
      %v409 = vld [vmem:[#allocation2 + $0x171] sm:$0xff]
      %v410 = vld [vmem:[#allocation2 + $0x2] sm:$0xff]
      %v411 = vld [vmem:[#allocation2 + $0xa] sm:$0xff]
      %v412 = vld [vmem:[#allocation2 + $0x1a] sm:$0xff]
      %v413 = vld [vmem:[#allocation2 + $0x22] sm:$0xff]
      %v414 = vld [vmem:[#allocation2 + $0x32] sm:$0xff]
      %v415 = vld [vmem:[#allocation2 + $0x3a] sm:$0xff]
      %v416 = vld [vmem:[#allocation2 + $0x4a] sm:$0xff]
      %v417 = vld [vmem:[#allocation2 + $0x52] sm:$0xff]
      %v418 = vld [vmem:[#allocation2 + $0x62] sm:$0xff]
      %v419 = vld [vmem:[#allocation2 + $0x6a] sm:$0xff]
      %v420 = vld [vmem:[#allocation2 + $0x7a] sm:$0xff]
      %v421 = vld [vmem:[#allocation2 + $0x82] sm:$0xff]
      %v422 = vld [vmem:[#allocation2 + $0x92] sm:$0xff]
      %v423 = vld [vmem:[#allocation2 + $0x9a] sm:$0xff]
      %v424 = vld [vmem:[#allocation2 + $0xaa] sm:$0xff]
      %v425 = vld [vmem:[#allocation2 + $0xb2] sm:$0xff]
      %v426 = vld [vmem:[#allocation2 + $0xc2] sm:$0xff]
      %v427 = vld [vmem:[#allocation2 + $0xca] sm:$0xff]
      %v428 = vld [vmem:[#allocation2 + $0xda] sm:$0xff]
      %v429 = vld [vmem:[#allocation2 + $0xe2] sm:$0xff]
      %v430 = vld [vmem:[#allocation2 + $0xf2] sm:$0xff]
      %v431 = vld [vmem:[#allocation2 + $0xfa] sm:$0xff]
      %v432 = vld [vmem:[#allocation2 + $0x10a] sm:$0xff]
      %v433 = vld [vmem:[#allocation2 + $0x112] sm:$0xff]
      %v434 = vld [vmem:[#allocation2 + $0x122] sm:$0xff]
      %v435 = vld [vmem:[#allocation2 + $0x12a] sm:$0xff]
      %v436 = vld [vmem:[#allocation2 + $0x13a] sm:$0xff]
      %v437 = vld [vmem:[#allocation2 + $0x142] sm:$0xff]
      %v438 = vld [vmem:[#allocation2 + $0x152] sm:$0xff]
      %v439 = vld [vmem:[#allocation2 + $0x15a] sm:$0xff]
      %v440 = vld [vmem:[#allocation2 + $0x16a] sm:$0xff]
      %v441 = vld [vmem:[#allocation2 + $0x172] sm:$0xff]
      %v442 = vld [vmem:[%s313] sm:$0xff]
      %v443 = vld [vmem:[%s313 + $0x8] sm:$0xff]
      %v444 = vld [vmem:[%s313 + $0x18] sm:$0xff]
      %v445 = vld [vmem:[%s313 + $0x20] sm:$0xff]
      %v446 = vld [vmem:[%s313 + $0x30] sm:$0xff]
      %v447 = vld [vmem:[%s313 + $0x38] sm:$0xff]
      %v448 = vld [vmem:[%s313 + $0x48] sm:$0xff]
      %v449 = vld [vmem:[%s313 + $0x50] sm:$0xff]
      %v450 = vld [vmem:[%s313 + $0x60] sm:$0xff]
      %v451 = vld [vmem:[%s313 + $0x68] sm:$0xff]
      %v452 = vld [vmem:[%s313 + $0x78] sm:$0xff]
      %v453 = vld [vmem:[%s313 + $0x80] sm:$0xff]
      %v454 = vld [vmem:[%s313 + $0x90] sm:$0xff]
      %v455 = vld [vmem:[%s313 + $0x98] sm:$0xff]
      %v456 = vld [vmem:[%s313 + $0xa8] sm:$0xff]
      %v457 = vld [vmem:[%s313 + $0xb0] sm:$0xff]
      %v458 = vld [vmem:[%s313 + $0xc0] sm:$0xff]
      %v459 = vld [vmem:[%s313 + $0xc8] sm:$0xff]
      %v460 = vld [vmem:[%s313 + $0xd8] sm:$0xff]
      %v461 = vld [vmem:[%s313 + $0xe0] sm:$0xff]
      %v462 = vld [vmem:[%s313 + $0xf0] sm:$0xff]
      %v463 = vld [vmem:[%s313 + $0xf8] sm:$0xff]
      %v464 = vld [vmem:[%s313 + $0x108] sm:$0xff]
      %v465 = vld [vmem:[%s313 + $0x110] sm:$0xff]
      %v466 = vld [vmem:[%s313 + $0x120] sm:$0xff]
      %v467 = vld [vmem:[%s313 + $0x128] sm:$0xff]
      %v468 = vld [vmem:[%s313 + $0x138] sm:$0xff]
      %v469 = vld [vmem:[%s313 + $0x140] sm:$0xff]
      %v470 = vld [vmem:[%s313 + $0x150] sm:$0xff]
      %v471 = vld [vmem:[%s313 + $0x158] sm:$0xff]
      %v472 = vld [vmem:[%s313 + $0x168] sm:$0xff]
      %v473 = vld [vmem:[%s313 + $0x170] sm:$0xff]
      %v474 = vld [vmem:[%s313 + $0x1] sm:$0xff]
      %v475 = vld [vmem:[%s313 + $0x9] sm:$0xff]
      %v476 = vld [vmem:[%s313 + $0x19] sm:$0xff]
      %v477 = vld [vmem:[%s313 + $0x21] sm:$0xff]
      %v478 = vld [vmem:[%s313 + $0x31] sm:$0xff]
      %v479 = vld [vmem:[%s313 + $0x39] sm:$0xff]
      %v480 = vld [vmem:[%s313 + $0x49] sm:$0xff]
      %v481 = vld [vmem:[%s313 + $0x51] sm:$0xff]
      %v482 = vld [vmem:[%s313 + $0x61] sm:$0xff]
      %v483 = vld [vmem:[%s313 + $0x69] sm:$0xff]
      %v484 = vld [vmem:[%s313 + $0x79] sm:$0xff]
      %v485 = vld [vmem:[%s313 + $0x81] sm:$0xff]
      %v486 = vld [vmem:[%s313 + $0x91] sm:$0xff]
      %v487 = vld [vmem:[%s313 + $0x99] sm:$0xff]
      %v488 = vld [vmem:[%s313 + $0xa9] sm:$0xff]
      %v489 = vld [vmem:[%s313 + $0xb1] sm:$0xff]
      %v490 = vld [vmem:[%s313 + $0xc1] sm:$0xff]
      %v491 = vld [vmem:[%s313 + $0xc9] sm:$0xff]
      %v492 = vld [vmem:[%s313 + $0xd9] sm:$0xff]
      %v493 = vld [vmem:[%s313 + $0xe1] sm:$0xff]
      %v494 = vld [vmem:[%s313 + $0xf1] sm:$0xff]
      %v495 = vld [vmem:[%s313 + $0xf9] sm:$0xff]
      %v496 = vld [vmem:[%s313 + $0x109] sm:$0xff]
      %v497 = vld [vmem:[%s313 + $0x111] sm:$0xff]
      %v498 = vld [vmem:[%s313 + $0x121] sm:$0xff]
      %v499 = vld [vmem:[%s313 + $0x129] sm:$0xff]
      %v500 = vld [vmem:[%s313 + $0x139] sm:$0xff]
      %v501 = vld [vmem:[%s313 + $0x141] sm:$0xff]
      %v502 = vld [vmem:[%s313 + $0x151] sm:$0xff]
      %v503 = vld [vmem:[%s313 + $0x159] sm:$0xff]
      %v504 = vld [vmem:[%s313 + $0x169] sm:$0xff]
      %v505 = vld [vmem:[%s313 + $0x171] sm:$0xff]
      %v506 = vld [vmem:[%s313 + $0x2] sm:$0xff]
      %v507 = vld [vmem:[%s313 + $0xa] sm:$0xff]
      %v508 = vld [vmem:[%s313 + $0x1a] sm:$0xff]
      %v509 = vld [vmem:[%s313 + $0x22] sm:$0xff]
      %v510 = vld [vmem:[%s313 + $0x32] sm:$0xff]
      %v511 = vld [vmem:[%s313 + $0x3a] sm:$0xff]
      %v512 = vld [vmem:[%s313 + $0x4a] sm:$0xff]
      %v513 = vld [vmem:[%s313 + $0x52] sm:$0xff]
      %v514 = vld [vmem:[%s313 + $0x62] sm:$0xff]
      %v515 = vld [vmem:[%s313 + $0x6a] sm:$0xff]
      %v516 = vld [vmem:[%s313 + $0x7a] sm:$0xff]
      %v517 = vld [vmem:[%s313 + $0x82] sm:$0xff]
      %v518 = vld [vmem:[%s313 + $0x92] sm:$0xff]
      %v519 = vld [vmem:[%s313 + $0x9a] sm:$0xff]
      %v520 = vld [vmem:[%s313 + $0xaa] sm:$0xff]
      %v521 = vld [vmem:[%s313 + $0xb2] sm:$0xff]
      %v522 = vld [vmem:[%s313 + $0xc2] sm:$0xff]
      %v523 = vld [vmem:[%s313 + $0xca] sm:$0xff]
      %v524 = vld [vmem:[%s313 + $0xda] sm:$0xff]
      %v525 = vld [vmem:[%s313 + $0xe2] sm:$0xff]
      %v526 = vld [vmem:[%s313 + $0xf2] sm:$0xff]
      %v527 = vld [vmem:[%s313 + $0xfa] sm:$0xff]
      %v528 = vld [vmem:[%s313 + $0x10a] sm:$0xff]
      %v529 = vld [vmem:[%s313 + $0x112] sm:$0xff]
      %v530 = vld [vmem:[%s313 + $0x122] sm:$0xff]
      %v531 = vld [vmem:[%s313 + $0x12a] sm:$0xff]
      %v532 = vld [vmem:[%s313 + $0x13a] sm:$0xff]
      %v533 = vld [vmem:[%s313 + $0x142] sm:$0xff]
      %v534 = vld [vmem:[%s313 + $0x152] sm:$0xff]
      %v535 = vld [vmem:[%s313 + $0x15a] sm:$0xff]
      %v536 = vld [vmem:[%s313 + $0x16a] sm:$0xff]
      %v537 = vld [vmem:[%s313 + $0x172] sm:$0xff]
      %s538 = scalar_lea.vmem [#allocation2], 48
      %v539 = vld [vmem:[%s538] sm:$0xff]
      %v540 = vld [vmem:[%s538 + $0x8] sm:$0xff]
      %v541 = vld [vmem:[%s538 + $0x18] sm:$0xff]
      %v542 = vld [vmem:[%s538 + $0x20] sm:$0xff]
      %v543 = vld [vmem:[%s538 + $0x30] sm:$0xff]
      %v544 = vld [vmem:[%s538 + $0x38] sm:$0xff]
      %v545 = vld [vmem:[%s538 + $0x48] sm:$0xff]
      %v546 = vld [vmem:[%s538 + $0x50] sm:$0xff]
      %v547 = vld [vmem:[%s538 + $0x60] sm:$0xff]
      %v548 = vld [vmem:[%s538 + $0x68] sm:$0xff]
      %v549 = vld [vmem:[%s538 + $0x78] sm:$0xff]
      %v550 = vld [vmem:[%s538 + $0x80] sm:$0xff]
      %v551 = vld [vmem:[%s538 + $0x90] sm:$0xff]
      %v552 = vld [vmem:[%s538 + $0x98] sm:$0xff]
      %v553 = vld [vmem:[%s538 + $0xa8] sm:$0xff]
      %v554 = vld [vmem:[%s538 + $0xb0] sm:$0xff]
      %v555 = vld [vmem:[%s538 + $0xc0] sm:$0xff]
      %v556 = vld [vmem:[%s538 + $0xc8] sm:$0xff]
      %v557 = vld [vmem:[%s538 + $0xd8] sm:$0xff]
      %v558 = vld [vmem:[%s538 + $0xe0] sm:$0xff]
      %v559 = vld [vmem:[%s538 + $0xf0] sm:$0xff]
      %v560 = vld [vmem:[%s538 + $0xf8] sm:$0xff]
      %v561 = vld [vmem:[%s538 + $0x108] sm:$0xff]
      %v562 = vld [vmem:[%s538 + $0x110] sm:$0xff]
      %v563 = vld [vmem:[%s538 + $0x120] sm:$0xff]
      %v564 = vld [vmem:[%s538 + $0x128] sm:$0xff]
      %v565 = vld [vmem:[%s538 + $0x138] sm:$0xff]
      %v566 = vld [vmem:[%s538 + $0x140] sm:$0xff]
      %v567 = vld [vmem:[%s538 + $0x150] sm:$0xff]
      %v568 = vld [vmem:[%s538 + $0x158] sm:$0xff]
      %v569 = vld [vmem:[%s538 + $0x168] sm:$0xff]
      %v570 = vld [vmem:[%s538 + $0x170] sm:$0xff]
      %v571 = vld [vmem:[%s538 + $0x1] sm:$0xff]
      %v572 = vld [vmem:[%s538 + $0x9] sm:$0xff]
      %v573 = vld [vmem:[%s538 + $0x19] sm:$0xff]
      %v574 = vld [vmem:[%s538 + $0x21] sm:$0xff]
      %v575 = vld [vmem:[%s538 + $0x31] sm:$0xff]
      %v576 = vld [vmem:[%s538 + $0x39] sm:$0xff]
      %v577 = vld [vmem:[%s538 + $0x49] sm:$0xff]
      %v578 = vld [vmem:[%s538 + $0x51] sm:$0xff]
      %v579 = vld [vmem:[%s538 + $0x61] sm:$0xff]
      %v580 = vld [vmem:[%s538 + $0x69] sm:$0xff]
      %v581 = vld [vmem:[%s538 + $0x79] sm:$0xff]
      %v582 = vld [vmem:[%s538 + $0x81] sm:$0xff]
      %v583 = vld [vmem:[%s538 + $0x91] sm:$0xff]
      %v584 = vld [vmem:[%s538 + $0x99] sm:$0xff]
      %v585 = vld [vmem:[%s538 + $0xa9] sm:$0xff]
      %v586 = vld [vmem:[%s538 + $0xb1] sm:$0xff]
      %v587 = vld [vmem:[%s538 + $0xc1] sm:$0xff]
      %v588 = vld [vmem:[%s538 + $0xc9] sm:$0xff]
      %v589 = vld [vmem:[%s538 + $0xd9] sm:$0xff]
      %v590 = vld [vmem:[%s538 + $0xe1] sm:$0xff]
      %v591 = vld [vmem:[%s538 + $0xf1] sm:$0xff]
      %v592 = vld [vmem:[%s538 + $0xf9] sm:$0xff]
      %v593 = vld [vmem:[%s538 + $0x109] sm:$0xff]
      %v594 = vld [vmem:[%s538 + $0x111] sm:$0xff]
      %v595 = vld [vmem:[%s538 + $0x121] sm:$0xff]
      %v596 = vld [vmem:[%s538 + $0x129] sm:$0xff]
      %v597 = vld [vmem:[%s538 + $0x139] sm:$0xff]
      %v598 = vld [vmem:[%s538 + $0x141] sm:$0xff]
      %v599 = vld [vmem:[%s538 + $0x151] sm:$0xff]
      %v600 = vld [vmem:[%s538 + $0x159] sm:$0xff]
      %v601 = vld [vmem:[%s538 + $0x169] sm:$0xff]
      %v602 = vld [vmem:[%s538 + $0x171] sm:$0xff]
      %v603 = vld [vmem:[%s538 + $0x2] sm:$0xff]
      %v604 = vld [vmem:[%s538 + $0xa] sm:$0xff]
      %v605 = vld [vmem:[%s538 + $0x1a] sm:$0xff]
      %v606 = vld [vmem:[%s538 + $0x22] sm:$0xff]
      %v607 = vld [vmem:[%s538 + $0x32] sm:$0xff]
      %v608 = vld [vmem:[%s538 + $0x3a] sm:$0xff]
      %v609 = vld [vmem:[%s538 + $0x4a] sm:$0xff]
      %v610 = vld [vmem:[%s538 + $0x52] sm:$0xff]
      %v611 = vld [vmem:[%s538 + $0x62] sm:$0xff]
      %v612 = vld [vmem:[%s538 + $0x6a] sm:$0xff]
      %v613 = vld [vmem:[%s538 + $0x7a] sm:$0xff]
      %v614 = vld [vmem:[%s538 + $0x82] sm:$0xff]
      %v615 = vld [vmem:[%s538 + $0x92] sm:$0xff]
      %v616 = vld [vmem:[%s538 + $0x9a] sm:$0xff]
      %v617 = vld [vmem:[%s538 + $0xaa] sm:$0xff]
      %v618 = vld [vmem:[%s538 + $0xb2] sm:$0xff]
      %v619 = vld [vmem:[%s538 + $0xc2] sm:$0xff]
      %v620 = vld [vmem:[%s538 + $0xca] sm:$0xff]
      %v621 = vld [vmem:[%s538 + $0xda] sm:$0xff]
      %v622 = vld [vmem:[%s538 + $0xe2] sm:$0xff]
      %v623 = vld [vmem:[%s538 + $0xf2] sm:$0xff]
      %v624 = vld [vmem:[%s538 + $0xfa] sm:$0xff]
      %v625 = vld [vmem:[%s538 + $0x10a] sm:$0xff]
      %v626 = vld [vmem:[%s538 + $0x112] sm:$0xff]
      %v627 = vld [vmem:[%s538 + $0x122] sm:$0xff]
      %v628 = vld [vmem:[%s538 + $0x12a] sm:$0xff]
      %v629 = vld [vmem:[%s538 + $0x13a] sm:$0xff]
      %v630 = vld [vmem:[%s538 + $0x142] sm:$0xff]
      %v631 = vld [vmem:[%s538 + $0x152] sm:$0xff]
      %v632 = vld [vmem:[%s538 + $0x15a] sm:$0xff]
      %v633 = vld [vmem:[%s538 + $0x16a] sm:$0xff]
      %v634 = vld [vmem:[%s538 + $0x172] sm:$0xff]
      %667 = vrot.lane.b32.xlu0 %v378, 4
      %v668 = vpop.permute.xlu0 %667
      %669 = vrot.lane.b32.xlu0 %v379, 4
      %v670 = vpop.permute.xlu0 %669
      %671 = vrot.lane.b32.xlu0 %v380, 4
      %v672 = vpop.permute.xlu0 %671
      %673 = vrot.lane.b32.xlu0 %v381, 4
      %v674 = vpop.permute.xlu0 %673
      %675 = vrot.lane.b32.xlu0 %v382, 4
      %v676 = vpop.permute.xlu0 %675
      %677 = vrot.lane.b32.xlu0 %v383, 4
      %v678 = vpop.permute.xlu0 %677
      %679 = vrot.lane.b32.xlu0 %v384, 4
      %v680 = vpop.permute.xlu0 %679
      %681 = vrot.lane.b32.xlu0 %v385, 4
      %v682 = vpop.permute.xlu0 %681
      %683 = vrot.lane.b32.xlu0 %v386, 4
      %v684 = vpop.permute.xlu0 %683
      %685 = vrot.lane.b32.xlu0 %v387, 4
      %v686 = vpop.permute.xlu0 %685
      %687 = vrot.lane.b32.xlu0 %v388, 4
      %v688 = vpop.permute.xlu0 %687
      %689 = vrot.lane.b32.xlu0 %v389, 4
      %v690 = vpop.permute.xlu0 %689
      %691 = vrot.lane.b32.xlu0 %v390, 4
      %v692 = vpop.permute.xlu0 %691
      %693 = vrot.lane.b32.xlu0 %v391, 4
      %v694 = vpop.permute.xlu0 %693
      %695 = vrot.lane.b32.xlu0 %v392, 4
      %v696 = vpop.permute.xlu0 %695
      %697 = vrot.lane.b32.xlu0 %v393, 4
      %v698 = vpop.permute.xlu0 %697
      %699 = vrot.lane.b32.xlu0 %v394, 4
      %v700 = vpop.permute.xlu0 %699
      %701 = vrot.lane.b32.xlu0 %v395, 4
      %v702 = vpop.permute.xlu0 %701
      %703 = vrot.lane.b32.xlu0 %v396, 4
      %v704 = vpop.permute.xlu0 %703
      %705 = vrot.lane.b32.xlu0 %v397, 4
      %v706 = vpop.permute.xlu0 %705
      %707 = vrot.lane.b32.xlu0 %v398, 4
      %v708 = vpop.permute.xlu0 %707
      %709 = vrot.lane.b32.xlu0 %v399, 4
      %v710 = vpop.permute.xlu0 %709
      %711 = vrot.lane.b32.xlu0 %v400, 4
      %v712 = vpop.permute.xlu0 %711
      %713 = vrot.lane.b32.xlu0 %v401, 4
      %v714 = vpop.permute.xlu0 %713
      %715 = vrot.lane.b32.xlu0 %v402, 4
      %v716 = vpop.permute.xlu0 %715
      %717 = vrot.lane.b32.xlu0 %v403, 4
      %v718 = vpop.permute.xlu0 %717
      %719 = vrot.lane.b32.xlu0 %v404, 4
      %v720 = vpop.permute.xlu0 %719
      %721 = vrot.lane.b32.xlu0 %v405, 4
      %v722 = vpop.permute.xlu0 %721
      %723 = vrot.lane.b32.xlu0 %v406, 4
      %v724 = vpop.permute.xlu0 %723
      %725 = vrot.lane.b32.xlu0 %v407, 4
      %v726 = vpop.permute.xlu0 %725
      %727 = vrot.lane.b32.xlu0 %v408, 4
      %v728 = vpop.permute.xlu0 %727
      %729 = vrot.lane.b32.xlu0 %v409, 4
      %v730 = vpop.permute.xlu0 %729
      %795 = vrot.lane.b32.xlu0 %v410, 8
      %v796 = vpop.permute.xlu0 %795
      %797 = vrot.lane.b32.xlu0 %v411, 8
      %v798 = vpop.permute.xlu0 %797
      %799 = vrot.lane.b32.xlu0 %v412, 8
      %v800 = vpop.permute.xlu0 %799
      %801 = vrot.lane.b32.xlu0 %v413, 8
      %v802 = vpop.permute.xlu0 %801
      %803 = vrot.lane.b32.xlu0 %v414, 8
      %v804 = vpop.permute.xlu0 %803
      %805 = vrot.lane.b32.xlu0 %v415, 8
      %v806 = vpop.permute.xlu0 %805
      %807 = vrot.lane.b32.xlu0 %v416, 8
      %v808 = vpop.permute.xlu0 %807
      %809 = vrot.lane.b32.xlu0 %v417, 8
      %v810 = vpop.permute.xlu0 %809
      %811 = vrot.lane.b32.xlu0 %v418, 8
      %v812 = vpop.permute.xlu0 %811
      %813 = vrot.lane.b32.xlu0 %v419, 8
      %v814 = vpop.permute.xlu0 %813
      %815 = vrot.lane.b32.xlu0 %v420, 8
      %v816 = vpop.permute.xlu0 %815
      %817 = vrot.lane.b32.xlu0 %v421, 8
      %v818 = vpop.permute.xlu0 %817
      %819 = vrot.lane.b32.xlu0 %v422, 8
      %v820 = vpop.permute.xlu0 %819
      %821 = vrot.lane.b32.xlu0 %v423, 8
      %v822 = vpop.permute.xlu0 %821
      %823 = vrot.lane.b32.xlu0 %v424, 8
      %v824 = vpop.permute.xlu0 %823
      %825 = vrot.lane.b32.xlu0 %v425, 8
      %v826 = vpop.permute.xlu0 %825
      %827 = vrot.lane.b32.xlu0 %v426, 8
      %v828 = vpop.permute.xlu0 %827
      %829 = vrot.lane.b32.xlu0 %v427, 8
      %v830 = vpop.permute.xlu0 %829
      %831 = vrot.lane.b32.xlu0 %v428, 8
      %v832 = vpop.permute.xlu0 %831
      %833 = vrot.lane.b32.xlu0 %v429, 8
      %v834 = vpop.permute.xlu0 %833
      %835 = vrot.lane.b32.xlu0 %v430, 8
      %v836 = vpop.permute.xlu0 %835
      %837 = vrot.lane.b32.xlu0 %v431, 8
      %v838 = vpop.permute.xlu0 %837
      %839 = vrot.lane.b32.xlu0 %v432, 8
      %v840 = vpop.permute.xlu0 %839
      %841 = vrot.lane.b32.xlu0 %v433, 8
      %v842 = vpop.permute.xlu0 %841
      %843 = vrot.lane.b32.xlu0 %v434, 8
      %v844 = vpop.permute.xlu0 %843
      %845 = vrot.lane.b32.xlu0 %v435, 8
      %v846 = vpop.permute.xlu0 %845
      %847 = vrot.lane.b32.xlu0 %v436, 8
      %v848 = vpop.permute.xlu0 %847
      %849 = vrot.lane.b32.xlu0 %v437, 8
      %v850 = vpop.permute.xlu0 %849
      %851 = vrot.lane.b32.xlu0 %v438, 8
      %v852 = vpop.permute.xlu0 %851
      %853 = vrot.lane.b32.xlu0 %v439, 8
      %v854 = vpop.permute.xlu0 %853
      %855 = vrot.lane.b32.xlu0 %v440, 8
      %v856 = vpop.permute.xlu0 %855
      %857 = vrot.lane.b32.xlu0 %v441, 8
      %v858 = vpop.permute.xlu0 %857
      %923 = vrot.lane.b32.xlu0 %v442, 12
      %v924 = vpop.permute.xlu0 %923
      %925 = vrot.lane.b32.xlu0 %v443, 12
      %v926 = vpop.permute.xlu0 %925
      %927 = vrot.lane.b32.xlu0 %v444, 12
      %v928 = vpop.permute.xlu0 %927
      %929 = vrot.lane.b32.xlu0 %v445, 12
      %v930 = vpop.permute.xlu0 %929
      %931 = vrot.lane.b32.xlu0 %v446, 12
      %v932 = vpop.permute.xlu0 %931
      %933 = vrot.lane.b32.xlu0 %v447, 12
      %v934 = vpop.permute.xlu0 %933
      %935 = vrot.lane.b32.xlu0 %v448, 12
      %v936 = vpop.permute.xlu0 %935
      %937 = vrot.lane.b32.xlu0 %v449, 12
      %v938 = vpop.permute.xlu0 %937
      %939 = vrot.lane.b32.xlu0 %v450, 12
      %v940 = vpop.permute.xlu0 %939
      %941 = vrot.lane.b32.xlu0 %v451, 12
      %v942 = vpop.permute.xlu0 %941
      %943 = vrot.lane.b32.xlu0 %v452, 12
      %v944 = vpop.permute.xlu0 %943
      %945 = vrot.lane.b32.xlu0 %v453, 12
      %v946 = vpop.permute.xlu0 %945
      %947 = vrot.lane.b32.xlu0 %v454, 12
      %v948 = vpop.permute.xlu0 %947
      %949 = vrot.lane.b32.xlu0 %v455, 12
      %v950 = vpop.permute.xlu0 %949
      %951 = vrot.lane.b32.xlu0 %v456, 12
      %v952 = vpop.permute.xlu0 %951
      %953 = vrot.lane.b32.xlu0 %v457, 12
      %v954 = vpop.permute.xlu0 %953
      %955 = vrot.lane.b32.xlu0 %v458, 12
      %v956 = vpop.permute.xlu0 %955
      %957 = vrot.lane.b32.xlu0 %v459, 12
      %v958 = vpop.permute.xlu0 %957
      %959 = vrot.lane.b32.xlu0 %v460, 12
      %v960 = vpop.permute.xlu0 %959
      %961 = vrot.lane.b32.xlu0 %v461, 12
      %v962 = vpop.permute.xlu0 %961
      %963 = vrot.lane.b32.xlu0 %v462, 12
      %v964 = vpop.permute.xlu0 %963
      %965 = vrot.lane.b32.xlu0 %v463, 12
      %v966 = vpop.permute.xlu0 %965
      %967 = vrot.lane.b32.xlu0 %v464, 12
      %v968 = vpop.permute.xlu0 %967
      %969 = vrot.lane.b32.xlu0 %v465, 12
      %v970 = vpop.permute.xlu0 %969
      %971 = vrot.lane.b32.xlu0 %v466, 12
      %v972 = vpop.permute.xlu0 %971
      %973 = vrot.lane.b32.xlu0 %v467, 12
      %v974 = vpop.permute.xlu0 %973
      %975 = vrot.lane.b32.xlu0 %v468, 12
      %v976 = vpop.permute.xlu0 %975
      %977 = vrot.lane.b32.xlu0 %v469, 12
      %v978 = vpop.permute.xlu0 %977
      %979 = vrot.lane.b32.xlu0 %v470, 12
      %v980 = vpop.permute.xlu0 %979
      %981 = vrot.lane.b32.xlu0 %v471, 12
      %v982 = vpop.permute.xlu0 %981
      %983 = vrot.lane.b32.xlu0 %v472, 12
      %v984 = vpop.permute.xlu0 %983
      %985 = vrot.lane.b32.xlu0 %v473, 12
      %v986 = vpop.permute.xlu0 %985
      %1051 = vrot.lane.b32.xlu0 %v474, 16
      %v1052 = vpop.permute.xlu0 %1051
      %1053 = vrot.lane.b32.xlu0 %v475, 16
      %v1054 = vpop.permute.xlu0 %1053
      %1055 = vrot.lane.b32.xlu0 %v476, 16
      %v1056 = vpop.permute.xlu0 %1055
      %1057 = vrot.lane.b32.xlu0 %v477, 16
      %v1058 = vpop.permute.xlu0 %1057
      %1059 = vrot.lane.b32.xlu0 %v478, 16
      %v1060 = vpop.permute.xlu0 %1059
      %1061 = vrot.lane.b32.xlu0 %v479, 16
      %v1062 = vpop.permute.xlu0 %1061
      %1063 = vrot.lane.b32.xlu0 %v480, 16
      %v1064 = vpop.permute.xlu0 %1063
      %1065 = vrot.lane.b32.xlu0 %v481, 16
      %v1066 = vpop.permute.xlu0 %1065
      %1067 = vrot.lane.b32.xlu0 %v482, 16
      %v1068 = vpop.permute.xlu0 %1067
      %1069 = vrot.lane.b32.xlu0 %v483, 16
      %v1070 = vpop.permute.xlu0 %1069
      %1071 = vrot.lane.b32.xlu0 %v484, 16
      %v1072 = vpop.permute.xlu0 %1071
      %1073 = vrot.lane.b32.xlu0 %v485, 16
      %v1074 = vpop.permute.xlu0 %1073
      %1075 = vrot.lane.b32.xlu0 %v486, 16
      %v1076 = vpop.permute.xlu0 %1075
      %1077 = vrot.lane.b32.xlu0 %v487, 16
      %v1078 = vpop.permute.xlu0 %1077
      %1079 = vrot.lane.b32.xlu0 %v488, 16
      %v1080 = vpop.permute.xlu0 %1079
      %1081 = vrot.lane.b32.xlu0 %v489, 16
      %v1082 = vpop.permute.xlu0 %1081
      %1083 = vrot.lane.b32.xlu0 %v490, 16
      %v1084 = vpop.permute.xlu0 %1083
      %1085 = vrot.lane.b32.xlu0 %v491, 16
      %v1086 = vpop.permute.xlu0 %1085
      %1087 = vrot.lane.b32.xlu0 %v492, 16
      %v1088 = vpop.permute.xlu0 %1087
      %1089 = vrot.lane.b32.xlu0 %v493, 16
      %v1090 = vpop.permute.xlu0 %1089
      %1091 = vrot.lane.b32.xlu0 %v494, 16
      %v1092 = vpop.permute.xlu0 %1091
      %1093 = vrot.lane.b32.xlu0 %v495, 16
      %v1094 = vpop.permute.xlu0 %1093
      %1095 = vrot.lane.b32.xlu0 %v496, 16
      %v1096 = vpop.permute.xlu0 %1095
      %1097 = vrot.lane.b32.xlu0 %v497, 16
      %v1098 = vpop.permute.xlu0 %1097
      %1099 = vrot.lane.b32.xlu0 %v498, 16
      %v1100 = vpop.permute.xlu0 %1099
      %1101 = vrot.lane.b32.xlu0 %v499, 16
      %v1102 = vpop.permute.xlu0 %1101
      %1103 = vrot.lane.b32.xlu0 %v500, 16
      %v1104 = vpop.permute.xlu0 %1103
      %1105 = vrot.lane.b32.xlu0 %v501, 16
      %v1106 = vpop.permute.xlu0 %1105
      %1107 = vrot.lane.b32.xlu0 %v502, 16
      %v1108 = vpop.permute.xlu0 %1107
      %1109 = vrot.lane.b32.xlu0 %v503, 16
      %v1110 = vpop.permute.xlu0 %1109
      %1111 = vrot.lane.b32.xlu0 %v504, 16
      %v1112 = vpop.permute.xlu0 %1111
      %1113 = vrot.lane.b32.xlu0 %v505, 16
      %v1114 = vpop.permute.xlu0 %1113
      %1179 = vrot.lane.b32.xlu0 %v506, 20
      %v1180 = vpop.permute.xlu0 %1179
      %1181 = vrot.lane.b32.xlu0 %v507, 20
      %v1182 = vpop.permute.xlu0 %1181
      %1183 = vrot.lane.b32.xlu0 %v508, 20
      %v1184 = vpop.permute.xlu0 %1183
      %1185 = vrot.lane.b32.xlu0 %v509, 20
      %v1186 = vpop.permute.xlu0 %1185
      %1187 = vrot.lane.b32.xlu0 %v510, 20
      %v1188 = vpop.permute.xlu0 %1187
      %1189 = vrot.lane.b32.xlu0 %v511, 20
      %v1190 = vpop.permute.xlu0 %1189
      %1191 = vrot.lane.b32.xlu0 %v512, 20
      %v1192 = vpop.permute.xlu0 %1191
      %1193 = vrot.lane.b32.xlu0 %v513, 20
      %v1194 = vpop.permute.xlu0 %1193
      %1195 = vrot.lane.b32.xlu0 %v514, 20
      %v1196 = vpop.permute.xlu0 %1195
      %1197 = vrot.lane.b32.xlu0 %v515, 20
      %v1198 = vpop.permute.xlu0 %1197
      %1199 = vrot.lane.b32.xlu0 %v516, 20
      %v1200 = vpop.permute.xlu0 %1199
      %1201 = vrot.lane.b32.xlu0 %v517, 20
      %v1202 = vpop.permute.xlu0 %1201
      %1203 = vrot.lane.b32.xlu0 %v518, 20
      %v1204 = vpop.permute.xlu0 %1203
      %1205 = vrot.lane.b32.xlu0 %v519, 20
      %v1206 = vpop.permute.xlu0 %1205
      %1207 = vrot.lane.b32.xlu0 %v520, 20
      %v1208 = vpop.permute.xlu0 %1207
      %1209 = vrot.lane.b32.xlu0 %v521, 20
      %v1210 = vpop.permute.xlu0 %1209
      %1211 = vrot.lane.b32.xlu0 %v522, 20
      %v1212 = vpop.permute.xlu0 %1211
      %1213 = vrot.lane.b32.xlu0 %v523, 20
      %v1214 = vpop.permute.xlu0 %1213
      %1215 = vrot.lane.b32.xlu0 %v524, 20
      %v1216 = vpop.permute.xlu0 %1215
      %1217 = vrot.lane.b32.xlu0 %v525, 20
      %v1218 = vpop.permute.xlu0 %1217
      %1219 = vrot.lane.b32.xlu0 %v526, 20
      %v1220 = vpop.permute.xlu0 %1219
      %1221 = vrot.lane.b32.xlu0 %v527, 20
      %v1222 = vpop.permute.xlu0 %1221
      %1223 = vrot.lane.b32.xlu0 %v528, 20
      %v1224 = vpop.permute.xlu0 %1223
      %1225 = vrot.lane.b32.xlu0 %v529, 20
      %v1226 = vpop.permute.xlu0 %1225
      %1227 = vrot.lane.b32.xlu0 %v530, 20
      %v1228 = vpop.permute.xlu0 %1227
      %1229 = vrot.lane.b32.xlu0 %v531, 20
      %v1230 = vpop.permute.xlu0 %1229
      %1231 = vrot.lane.b32.xlu0 %v532, 20
      %v1232 = vpop.permute.xlu0 %1231
      %1233 = vrot.lane.b32.xlu0 %v533, 20
      %v1234 = vpop.permute.xlu0 %1233
      %1235 = vrot.lane.b32.xlu0 %v534, 20
      %v1236 = vpop.permute.xlu0 %1235
      %1237 = vrot.lane.b32.xlu0 %v535, 20
      %v1238 = vpop.permute.xlu0 %1237
      %1239 = vrot.lane.b32.xlu0 %v536, 20
      %v1240 = vpop.permute.xlu0 %1239
      %1241 = vrot.lane.b32.xlu0 %v537, 20
      %v1242 = vpop.permute.xlu0 %1241
      %1307 = vrot.lane.b32.xlu0 %v539, 24
      %v1308 = vpop.permute.xlu0 %1307
      %1309 = vrot.lane.b32.xlu0 %v540, 24
      %v1310 = vpop.permute.xlu0 %1309
      %1311 = vrot.lane.b32.xlu0 %v541, 24
      %v1312 = vpop.permute.xlu0 %1311
      %1313 = vrot.lane.b32.xlu0 %v542, 24
      %v1314 = vpop.permute.xlu0 %1313
      %1315 = vrot.lane.b32.xlu0 %v543, 24
      %v1316 = vpop.permute.xlu0 %1315
      %1317 = vrot.lane.b32.xlu0 %v544, 24
      %v1318 = vpop.permute.xlu0 %1317
      %1319 = vrot.lane.b32.xlu0 %v545, 24
      %v1320 = vpop.permute.xlu0 %1319
      %1321 = vrot.lane.b32.xlu0 %v546, 24
      %v1322 = vpop.permute.xlu0 %1321
      %1323 = vrot.lane.b32.xlu0 %v547, 24
      %v1324 = vpop.permute.xlu0 %1323
      %1325 = vrot.lane.b32.xlu0 %v548, 24
      %v1326 = vpop.permute.xlu0 %1325
      %1327 = vrot.lane.b32.xlu0 %v549, 24
      %v1328 = vpop.permute.xlu0 %1327
      %1329 = vrot.lane.b32.xlu0 %v550, 24
      %v1330 = vpop.permute.xlu0 %1329
      %1331 = vrot.lane.b32.xlu0 %v551, 24
      %v1332 = vpop.permute.xlu0 %1331
      %1333 = vrot.lane.b32.xlu0 %v552, 24
      %v1334 = vpop.permute.xlu0 %1333
      %1335 = vrot.lane.b32.xlu0 %v553, 24
      %v1336 = vpop.permute.xlu0 %1335
      %1337 = vrot.lane.b32.xlu0 %v554, 24
      %v1338 = vpop.permute.xlu0 %1337
      %1339 = vrot.lane.b32.xlu0 %v555, 24
      %v1340 = vpop.permute.xlu0 %1339
      %1341 = vrot.lane.b32.xlu0 %v556, 24
      %v1342 = vpop.permute.xlu0 %1341
      %1343 = vrot.lane.b32.xlu0 %v557, 24
      %v1344 = vpop.permute.xlu0 %1343
      %1345 = vrot.lane.b32.xlu0 %v558, 24
      %v1346 = vpop.permute.xlu0 %1345
      %1347 = vrot.lane.b32.xlu0 %v559, 24
      %v1348 = vpop.permute.xlu0 %1347
      %1349 = vrot.lane.b32.xlu0 %v560, 24
      %v1350 = vpop.permute.xlu0 %1349
      %1351 = vrot.lane.b32.xlu0 %v561, 24
      %v1352 = vpop.permute.xlu0 %1351
      %1353 = vrot.lane.b32.xlu0 %v562, 24
      %v1354 = vpop.permute.xlu0 %1353
      %1355 = vrot.lane.b32.xlu0 %v563, 24
      %v1356 = vpop.permute.xlu0 %1355
      %1357 = vrot.lane.b32.xlu0 %v564, 24
      %v1358 = vpop.permute.xlu0 %1357
      %1359 = vrot.lane.b32.xlu0 %v565, 24
      %v1360 = vpop.permute.xlu0 %1359
      %1361 = vrot.lane.b32.xlu0 %v566, 24
      %v1362 = vpop.permute.xlu0 %1361
      %1363 = vrot.lane.b32.xlu0 %v567, 24
      %v1364 = vpop.permute.xlu0 %1363
      %1365 = vrot.lane.b32.xlu0 %v568, 24
      %v1366 = vpop.permute.xlu0 %1365
      %1367 = vrot.lane.b32.xlu0 %v569, 24
      %v1368 = vpop.permute.xlu0 %1367
      %1369 = vrot.lane.b32.xlu0 %v570, 24
      %v1370 = vpop.permute.xlu0 %1369
      %1435 = vrot.lane.b32.xlu0 %v571, 28
      %v1436 = vpop.permute.xlu0 %1435
      %1437 = vrot.lane.b32.xlu0 %v572, 28
      %v1438 = vpop.permute.xlu0 %1437
      %1439 = vrot.lane.b32.xlu0 %v573, 28
      %v1440 = vpop.permute.xlu0 %1439
      %1441 = vrot.lane.b32.xlu0 %v574, 28
      %v1442 = vpop.permute.xlu0 %1441
      %1443 = vrot.lane.b32.xlu0 %v575, 28
      %v1444 = vpop.permute.xlu0 %1443
      %1445 = vrot.lane.b32.xlu0 %v576, 28
      %v1446 = vpop.permute.xlu0 %1445
      %1447 = vrot.lane.b32.xlu0 %v577, 28
      %v1448 = vpop.permute.xlu0 %1447
      %1449 = vrot.lane.b32.xlu0 %v578, 28
      %v1450 = vpop.permute.xlu0 %1449
      %1451 = vrot.lane.b32.xlu0 %v579, 28
      %v1452 = vpop.permute.xlu0 %1451
      %1453 = vrot.lane.b32.xlu0 %v580, 28
      %v1454 = vpop.permute.xlu0 %1453
      %1455 = vrot.lane.b32.xlu0 %v581, 28
      %v1456 = vpop.permute.xlu0 %1455
      %1457 = vrot.lane.b32.xlu0 %v582, 28
      %v1458 = vpop.permute.xlu0 %1457
      %1459 = vrot.lane.b32.xlu0 %v583, 28
      %v1460 = vpop.permute.xlu0 %1459
      %1461 = vrot.lane.b32.xlu0 %v584, 28
      %v1462 = vpop.permute.xlu0 %1461
      %1463 = vrot.lane.b32.xlu0 %v585, 28
      %v1464 = vpop.permute.xlu0 %1463
      %1465 = vrot.lane.b32.xlu0 %v586, 28
      %v1466 = vpop.permute.xlu0 %1465
      %1467 = vrot.lane.b32.xlu0 %v587, 28
      %v1468 = vpop.permute.xlu0 %1467
      %1469 = vrot.lane.b32.xlu0 %v588, 28
      %v1470 = vpop.permute.xlu0 %1469
      %1471 = vrot.lane.b32.xlu0 %v589, 28
      %v1472 = vpop.permute.xlu0 %1471
      %1473 = vrot.lane.b32.xlu0 %v590, 28
      %v1474 = vpop.permute.xlu0 %1473
      %1475 = vrot.lane.b32.xlu0 %v591, 28
      %v1476 = vpop.permute.xlu0 %1475
      %1477 = vrot.lane.b32.xlu0 %v592, 28
      %v1478 = vpop.permute.xlu0 %1477
      %1479 = vrot.lane.b32.xlu0 %v593, 28
      %v1480 = vpop.permute.xlu0 %1479
      %1481 = vrot.lane.b32.xlu0 %v594, 28
      %v1482 = vpop.permute.xlu0 %1481
      %1483 = vrot.lane.b32.xlu0 %v595, 28
      %v1484 = vpop.permute.xlu0 %1483
      %1485 = vrot.lane.b32.xlu0 %v596, 28
      %v1486 = vpop.permute.xlu0 %1485
      %1487 = vrot.lane.b32.xlu0 %v597, 28
      %v1488 = vpop.permute.xlu0 %1487
      %1489 = vrot.lane.b32.xlu0 %v598, 28
      %v1490 = vpop.permute.xlu0 %1489
      %1491 = vrot.lane.b32.xlu0 %v599, 28
      %v1492 = vpop.permute.xlu0 %1491
      %1493 = vrot.lane.b32.xlu0 %v600, 28
      %v1494 = vpop.permute.xlu0 %1493
      %1495 = vrot.lane.b32.xlu0 %v601, 28
      %v1496 = vpop.permute.xlu0 %1495
      %1497 = vrot.lane.b32.xlu0 %v602, 28
      %v1498 = vpop.permute.xlu0 %1497
      %1563 = vrot.lane.b32.xlu0 %v603, 32
      %v1564 = vpop.permute.xlu0 %1563
      %1565 = vrot.lane.b32.xlu0 %v604, 32
      %v1566 = vpop.permute.xlu0 %1565
      %1567 = vrot.lane.b32.xlu0 %v605, 32
      %v1568 = vpop.permute.xlu0 %1567
      %1569 = vrot.lane.b32.xlu0 %v606, 32
      %v1570 = vpop.permute.xlu0 %1569
      %1571 = vrot.lane.b32.xlu0 %v607, 32
      %v1572 = vpop.permute.xlu0 %1571
      %1573 = vrot.lane.b32.xlu0 %v608, 32
      %v1574 = vpop.permute.xlu0 %1573
      %1575 = vrot.lane.b32.xlu0 %v609, 32
      %v1576 = vpop.permute.xlu0 %1575
      %1577 = vrot.lane.b32.xlu0 %v610, 32
      %v1578 = vpop.permute.xlu0 %1577
      %1579 = vrot.lane.b32.xlu0 %v611, 32
      %v1580 = vpop.permute.xlu0 %1579
      %1581 = vrot.lane.b32.xlu0 %v612, 32
      %v1582 = vpop.permute.xlu0 %1581
      %1583 = vrot.lane.b32.xlu0 %v613, 32
      %v1584 = vpop.permute.xlu0 %1583
      %1585 = vrot.lane.b32.xlu0 %v614, 32
      %v1586 = vpop.permute.xlu0 %1585
      %1587 = vrot.lane.b32.xlu0 %v615, 32
      %v1588 = vpop.permute.xlu0 %1587
      %1589 = vrot.lane.b32.xlu0 %v616, 32
      %v1590 = vpop.permute.xlu0 %1589
      %1591 = vrot.lane.b32.xlu0 %v617, 32
      %v1592 = vpop.permute.xlu0 %1591
      %1593 = vrot.lane.b32.xlu0 %v618, 32
      %v1594 = vpop.permute.xlu0 %1593
      %1595 = vrot.lane.b32.xlu0 %v619, 32
      %v1596 = vpop.permute.xlu0 %1595
      %1597 = vrot.lane.b32.xlu0 %v620, 32
      %v1598 = vpop.permute.xlu0 %1597
      %1599 = vrot.lane.b32.xlu0 %v621, 32
      %v1600 = vpop.permute.xlu0 %1599
      %1601 = vrot.lane.b32.xlu0 %v622, 32
      %v1602 = vpop.permute.xlu0 %1601
      %1603 = vrot.lane.b32.xlu0 %v623, 32
      %v1604 = vpop.permute.xlu0 %1603
      %1605 = vrot.lane.b32.xlu0 %v624, 32
      %v1606 = vpop.permute.xlu0 %1605
      %1607 = vrot.lane.b32.xlu0 %v625, 32
      %v1608 = vpop.permute.xlu0 %1607
      %1609 = vrot.lane.b32.xlu0 %v626, 32
      %v1610 = vpop.permute.xlu0 %1609
      %1611 = vrot.lane.b32.xlu0 %v627, 32
      %v1612 = vpop.permute.xlu0 %1611
      %1613 = vrot.lane.b32.xlu0 %v628, 32
      %v1614 = vpop.permute.xlu0 %1613
      %1615 = vrot.lane.b32.xlu0 %v629, 32
      %v1616 = vpop.permute.xlu0 %1615
      %1617 = vrot.lane.b32.xlu0 %v630, 32
      %v1618 = vpop.permute.xlu0 %1617
      %1619 = vrot.lane.b32.xlu0 %v631, 32
      %v1620 = vpop.permute.xlu0 %1619
      %1621 = vrot.lane.b32.xlu0 %v632, 32
      %v1622 = vpop.permute.xlu0 %1621
      %1623 = vrot.lane.b32.xlu0 %v633, 32
      %v1624 = vpop.permute.xlu0 %1623
      %1625 = vrot.lane.b32.xlu0 %v634, 32
      %v1626 = vpop.permute.xlu0 %1625
      %v1659 = vsel %vm225, %v346, %v668
      %v1660 = vsel %vm225, %v347, %v670
      %v1661 = vsel %vm225, %v348, %v672
      %v1662 = vsel %vm225, %v349, %v674
      %v1663 = vsel %vm225, %v350, %v676
      %v1664 = vsel %vm225, %v351, %v678
      %v1665 = vsel %vm225, %v352, %v680
      %v1666 = vsel %vm225, %v353, %v682
      %v1667 = vsel %vm225, %v354, %v684
      %v1668 = vsel %vm225, %v355, %v686
      %v1669 = vsel %vm225, %v356, %v688
      %v1670 = vsel %vm225, %v357, %v690
      %v1671 = vsel %vm225, %v358, %v692
      %v1672 = vsel %vm225, %v359, %v694
      %v1673 = vsel %vm225, %v360, %v696
      %v1674 = vsel %vm225, %v361, %v698
      %v1675 = vsel %vm225, %v362, %v700
      %v1676 = vsel %vm225, %v363, %v702
      %v1677 = vsel %vm225, %v364, %v704
      %v1678 = vsel %vm225, %v365, %v706
      %v1679 = vsel %vm225, %v366, %v708
      %v1680 = vsel %vm225, %v367, %v710
      %v1681 = vsel %vm225, %v368, %v712
      %v1682 = vsel %vm225, %v369, %v714
      %v1683 = vsel %vm225, %v370, %v716
      %v1684 = vsel %vm225, %v371, %v718
      %v1685 = vsel %vm225, %v372, %v720
      %v1686 = vsel %vm225, %v373, %v722
      %v1687 = vsel %vm225, %v374, %v724
      %v1688 = vsel %vm225, %v375, %v726
      %v1689 = vsel %vm225, %v376, %v728
      %v1690 = vsel %vm225, %v377, %v730
      %vm1691 = vcmask 64512
      %v1692 = vsel %vm1691, %v1659, %v796
      %v1693 = vsel %vm1691, %v1660, %v798
      %v1694 = vsel %vm1691, %v1661, %v800
      %v1695 = vsel %vm1691, %v1662, %v802
      %v1696 = vsel %vm1691, %v1663, %v804
      %v1697 = vsel %vm1691, %v1664, %v806
      %v1698 = vsel %vm1691, %v1665, %v808
      %v1699 = vsel %vm1691, %v1666, %v810
      %v1700 = vsel %vm1691, %v1667, %v812
      %v1701 = vsel %vm1691, %v1668, %v814
      %v1702 = vsel %vm1691, %v1669, %v816
      %v1703 = vsel %vm1691, %v1670, %v818
      %v1704 = vsel %vm1691, %v1671, %v820
      %v1705 = vsel %vm1691, %v1672, %v822
      %v1706 = vsel %vm1691, %v1673, %v824
      %v1707 = vsel %vm1691, %v1674, %v826
      %v1708 = vsel %vm1691, %v1675, %v828
      %v1709 = vsel %vm1691, %v1676, %v830
      %v1710 = vsel %vm1691, %v1677, %v832
      %v1711 = vsel %vm1691, %v1678, %v834
      %v1712 = vsel %vm1691, %v1679, %v836
      %v1713 = vsel %vm1691, %v1680, %v838
      %v1714 = vsel %vm1691, %v1681, %v840
      %v1715 = vsel %vm1691, %v1682, %v842
      %v1716 = vsel %vm1691, %v1683, %v844
      %v1717 = vsel %vm1691, %v1684, %v846
      %v1718 = vsel %vm1691, %v1685, %v848
      %v1719 = vsel %vm1691, %v1686, %v850
      %v1720 = vsel %vm1691, %v1687, %v852
      %v1721 = vsel %vm1691, %v1688, %v854
      %v1722 = vsel %vm1691, %v1689, %v856
      %v1723 = vsel %vm1691, %v1690, %v858
      %vm1724 = vcmask 97280
      %v1725 = vsel %vm1724, %v1692, %v924
      %v1726 = vsel %vm1724, %v1693, %v926
      %v1727 = vsel %vm1724, %v1694, %v928
      %v1728 = vsel %vm1724, %v1695, %v930
      %v1729 = vsel %vm1724, %v1696, %v932
      %v1730 = vsel %vm1724, %v1697, %v934
      %v1731 = vsel %vm1724, %v1698, %v936
      %v1732 = vsel %vm1724, %v1699, %v938
      %v1733 = vsel %vm1724, %v1700, %v940
      %v1734 = vsel %vm1724, %v1701, %v942
      %v1735 = vsel %vm1724, %v1702, %v944
      %v1736 = vsel %vm1724, %v1703, %v946
      %v1737 = vsel %vm1724, %v1704, %v948
      %v1738 = vsel %vm1724, %v1705, %v950
      %v1739 = vsel %vm1724, %v1706, %v952
      %v1740 = vsel %vm1724, %v1707, %v954
      %v1741 = vsel %vm1724, %v1708, %v956
      %v1742 = vsel %vm1724, %v1709, %v958
      %v1743 = vsel %vm1724, %v1710, %v960
      %v1744 = vsel %vm1724, %v1711, %v962
      %v1745 = vsel %vm1724, %v1712, %v964
      %v1746 = vsel %vm1724, %v1713, %v966
      %v1747 = vsel %vm1724, %v1714, %v968
      %v1748 = vsel %vm1724, %v1715, %v970
      %v1749 = vsel %vm1724, %v1716, %v972
      %v1750 = vsel %vm1724, %v1717, %v974
      %v1751 = vsel %vm1724, %v1718, %v976
      %v1752 = vsel %vm1724, %v1719, %v978
      %v1753 = vsel %vm1724, %v1720, %v980
      %v1754 = vsel %vm1724, %v1721, %v982
      %v1755 = vsel %vm1724, %v1722, %v984
      %v1756 = vsel %vm1724, %v1723, %v986
      %vm1757 = vcmask 130048
      %v1758 = vsel %vm1757, %v1725, %v1052
      %v1759 = vsel %vm1757, %v1726, %v1054
      %v1760 = vsel %vm1757, %v1727, %v1056
      %v1761 = vsel %vm1757, %v1728, %v1058
      %v1762 = vsel %vm1757, %v1729, %v1060
      %v1763 = vsel %vm1757, %v1730, %v1062
      %v1764 = vsel %vm1757, %v1731, %v1064
      %v1765 = vsel %vm1757, %v1732, %v1066
      %v1766 = vsel %vm1757, %v1733, %v1068
      %v1767 = vsel %vm1757, %v1734, %v1070
      %v1768 = vsel %vm1757, %v1735, %v1072
      %v1769 = vsel %vm1757, %v1736, %v1074
      %v1770 = vsel %vm1757, %v1737, %v1076
      %v1771 = vsel %vm1757, %v1738, %v1078
      %v1772 = vsel %vm1757, %v1739, %v1080
      %v1773 = vsel %vm1757, %v1740, %v1082
      %v1774 = vsel %vm1757, %v1741, %v1084
      %v1775 = vsel %vm1757, %v1742, %v1086
      %v1776 = vsel %vm1757, %v1743, %v1088
      %v1777 = vsel %vm1757, %v1744, %v1090
      %v1778 = vsel %vm1757, %v1745, %v1092
      %v1779 = vsel %vm1757, %v1746, %v1094
      %v1780 = vsel %vm1757, %v1747, %v1096
      %v1781 = vsel %vm1757, %v1748, %v1098
      %v1782 = vsel %vm1757, %v1749, %v1100
      %v1783 = vsel %vm1757, %v1750, %v1102
      %v1784 = vsel %vm1757, %v1751, %v1104
      %v1785 = vsel %vm1757, %v1752, %v1106
      %v1786 = vsel %vm1757, %v1753, %v1108
      %v1787 = vsel %vm1757, %v1754, %v1110
      %v1788 = vsel %vm1757, %v1755, %v1112
      %v1789 = vsel %vm1757, %v1756, %v1114
      %vm1790 = vcmask 162816
      %v1791 = vsel %vm1790, %v1758, %v1180
      %v1792 = vsel %vm1790, %v1759, %v1182
      %v1793 = vsel %vm1790, %v1760, %v1184
      %v1794 = vsel %vm1790, %v1761, %v1186
      %v1795 = vsel %vm1790, %v1762, %v1188
      %v1796 = vsel %vm1790, %v1763, %v1190
      %v1797 = vsel %vm1790, %v1764, %v1192
      %v1798 = vsel %vm1790, %v1765, %v1194
      %v1799 = vsel %vm1790, %v1766, %v1196
      %v1800 = vsel %vm1790, %v1767, %v1198
      %v1801 = vsel %vm1790, %v1768, %v1200
      %v1802 = vsel %vm1790, %v1769, %v1202
      %v1803 = vsel %vm1790, %v1770, %v1204
      %v1804 = vsel %vm1790, %v1771, %v1206
      %v1805 = vsel %vm1790, %v1772, %v1208
      %v1806 = vsel %vm1790, %v1773, %v1210
      %v1807 = vsel %vm1790, %v1774, %v1212
      %v1808 = vsel %vm1790, %v1775, %v1214
      %v1809 = vsel %vm1790, %v1776, %v1216
      %v1810 = vsel %vm1790, %v1777, %v1218
      %v1811 = vsel %vm1790, %v1778, %v1220
      %v1812 = vsel %vm1790, %v1779, %v1222
      %v1813 = vsel %vm1790, %v1780, %v1224
      %v1814 = vsel %vm1790, %v1781, %v1226
      %v1815 = vsel %vm1790, %v1782, %v1228
      %v1816 = vsel %vm1790, %v1783, %v1230
      %v1817 = vsel %vm1790, %v1784, %v1232
      %v1818 = vsel %vm1790, %v1785, %v1234
      %v1819 = vsel %vm1790, %v1786, %v1236
      %v1820 = vsel %vm1790, %v1787, %v1238
      %v1821 = vsel %vm1790, %v1788, %v1240
      %v1822 = vsel %vm1790, %v1789, %v1242
      %vm1823 = vcmask 195584
      %v1824 = vsel %vm1823, %v1791, %v1308
      %v1825 = vsel %vm1823, %v1792, %v1310
      %v1826 = vsel %vm1823, %v1793, %v1312
      %v1827 = vsel %vm1823, %v1794, %v1314
      %v1828 = vsel %vm1823, %v1795, %v1316
      %v1829 = vsel %vm1823, %v1796, %v1318
      %v1830 = vsel %vm1823, %v1797, %v1320
      %v1831 = vsel %vm1823, %v1798, %v1322
      %v1832 = vsel %vm1823, %v1799, %v1324
      %v1833 = vsel %vm1823, %v1800, %v1326
      %v1834 = vsel %vm1823, %v1801, %v1328
      %v1835 = vsel %vm1823, %v1802, %v1330
      %v1836 = vsel %vm1823, %v1803, %v1332
      %v1837 = vsel %vm1823, %v1804, %v1334
      %v1838 = vsel %vm1823, %v1805, %v1336
      %v1839 = vsel %vm1823, %v1806, %v1338
      %v1840 = vsel %vm1823, %v1807, %v1340
      %v1841 = vsel %vm1823, %v1808, %v1342
      %v1842 = vsel %vm1823, %v1809, %v1344
      %v1843 = vsel %vm1823, %v1810, %v1346
      %v1844 = vsel %vm1823, %v1811, %v1348
      %v1845 = vsel %vm1823, %v1812, %v1350
      %v1846 = vsel %vm1823, %v1813, %v1352
      %v1847 = vsel %vm1823, %v1814, %v1354
      %v1848 = vsel %vm1823, %v1815, %v1356
      %v1849 = vsel %vm1823, %v1816, %v1358
      %v1850 = vsel %vm1823, %v1817, %v1360
      %v1851 = vsel %vm1823, %v1818, %v1362
      %v1852 = vsel %vm1823, %v1819, %v1364
      %v1853 = vsel %vm1823, %v1820, %v1366
      %v1854 = vsel %vm1823, %v1821, %v1368
      %v1855 = vsel %vm1823, %v1822, %v1370
      %vm1856 = vcmask 228352
      %v1857 = vsel %vm1856, %v1824, %v1436
      %v1858 = vsel %vm1856, %v1825, %v1438
      %v1859 = vsel %vm1856, %v1826, %v1440
      %v1860 = vsel %vm1856, %v1827, %v1442
      %v1861 = vsel %vm1856, %v1828, %v1444
      %v1862 = vsel %vm1856, %v1829, %v1446
      %v1863 = vsel %vm1856, %v1830, %v1448
      %v1864 = vsel %vm1856, %v1831, %v1450
      %v1865 = vsel %vm1856, %v1832, %v1452
      %v1866 = vsel %vm1856, %v1833, %v1454
      %v1867 = vsel %vm1856, %v1834, %v1456
      %v1868 = vsel %vm1856, %v1835, %v1458
      %v1869 = vsel %vm1856, %v1836, %v1460
      %v1870 = vsel %vm1856, %v1837, %v1462
      %v1871 = vsel %vm1856, %v1838, %v1464
      %v1872 = vsel %vm1856, %v1839, %v1466
      %v1873 = vsel %vm1856, %v1840, %v1468
      %v1874 = vsel %vm1856, %v1841, %v1470
      %v1875 = vsel %vm1856, %v1842, %v1472
      %v1876 = vsel %vm1856, %v1843, %v1474
      %v1877 = vsel %vm1856, %v1844, %v1476
      %v1878 = vsel %vm1856, %v1845, %v1478
      %v1879 = vsel %vm1856, %v1846, %v1480
      %v1880 = vsel %vm1856, %v1847, %v1482
      %v1881 = vsel %vm1856, %v1848, %v1484
      %v1882 = vsel %vm1856, %v1849, %v1486
      %v1883 = vsel %vm1856, %v1850, %v1488
      %v1884 = vsel %vm1856, %v1851, %v1490
      %v1885 = vsel %vm1856, %v1852, %v1492
      %v1886 = vsel %vm1856, %v1853, %v1494
      %v1887 = vsel %vm1856, %v1854, %v1496
      %v1888 = vsel %vm1856, %v1855, %v1498
      %vm1889 = vcmask 261120
      %v1890 = vsel %vm1889, %v1857, %v1564
      %v1891 = vsel %vm1889, %v1858, %v1566
      %v1892 = vsel %vm1889, %v1859, %v1568
      %v1893 = vsel %vm1889, %v1860, %v1570
      %v1894 = vsel %vm1889, %v1861, %v1572
      %v1895 = vsel %vm1889, %v1862, %v1574
      %v1896 = vsel %vm1889, %v1863, %v1576
      %v1897 = vsel %vm1889, %v1864, %v1578
      %v1898 = vsel %vm1889, %v1865, %v1580
      %v1899 = vsel %vm1889, %v1866, %v1582
      %v1900 = vsel %vm1889, %v1867, %v1584
      %v1901 = vsel %vm1889, %v1868, %v1586
      %v1902 = vsel %vm1889, %v1869, %v1588
      %v1903 = vsel %vm1889, %v1870, %v1590
      %v1904 = vsel %vm1889, %v1871, %v1592
      %v1905 = vsel %vm1889, %v1872, %v1594
      %v1906 = vsel %vm1889, %v1873, %v1596
      %v1907 = vsel %vm1889, %v1874, %v1598
      %v1908 = vsel %vm1889, %v1875, %v1600
      %v1909 = vsel %vm1889, %v1876, %v1602
      %v1910 = vsel %vm1889, %v1877, %v1604
      %v1911 = vsel %vm1889, %v1878, %v1606
      %v1912 = vsel %vm1889, %v1879, %v1608
      %v1913 = vsel %vm1889, %v1880, %v1610
      %v1914 = vsel %vm1889, %v1881, %v1612
      %v1915 = vsel %vm1889, %v1882, %v1614
      %v1916 = vsel %vm1889, %v1883, %v1616
      %v1917 = vsel %vm1889, %v1884, %v1618
      %v1918 = vsel %vm1889, %v1885, %v1620
      %v1919 = vsel %vm1889, %v1886, %v1622
      %v1920 = vsel %vm1889, %v1887, %v1624
      %v1921 = vsel %vm1889, %v1888, %v1626
      %v1922 = vld [vmem:[%s1] sm:$0xff]
      %v1923 = vld [vmem:[%s1 + $0x8] sm:$0xff]
      %v1924 = vld [vmem:[%s1 + $0x10] sm:$0xff]
      %v1925 = vld [vmem:[%s1 + $0x18] sm:$0xff]
      %v1926 = vld [vmem:[%s1 + $0x20] sm:$0xf]
      %v1927 = vld [vmem:[%s2] sm:$0x1]
      %v1929 = vperm.slane %v1927, 0
      %vm1931 = vcmask 293888
      %v1933 = vsel %vm1931, %v1890, 0
      %v1936 = vsel %vm1931, %v1891, 0
      %v1939 = vsel %vm1931, %v1892, 0
      %v1942 = vsel %vm1931, %v1893, 0
      %v1945 = vsel %vm1931, %v1894, 0
      %v1948 = vsel %vm1931, %v1895, 0
      %v1951 = vsel %vm1931, %v1896, 0
      %v1954 = vsel %vm1931, %v1897, 0
      %v1957 = vsel %vm1931, %v1898, 0
      %v1960 = vsel %vm1931, %v1899, 0
      %v1963 = vsel %vm1931, %v1900, 0
      %v1966 = vsel %vm1931, %v1901, 0
      %v1969 = vsel %vm1931, %v1902, 0
      %v1972 = vsel %vm1931, %v1903, 0
      %v1975 = vsel %vm1931, %v1904, 0
      %v1978 = vsel %vm1931, %v1905, 0
      %v1981 = vsel %vm1931, %v1906, 0
      %v1984 = vsel %vm1931, %v1907, 0
      %v1987 = vsel %vm1931, %v1908, 0
      %v1990 = vsel %vm1931, %v1909, 0
      %v1993 = vsel %vm1931, %v1910, 0
      %v1996 = vsel %vm1931, %v1911, 0
      %v1999 = vsel %vm1931, %v1912, 0
      %v2002 = vsel %vm1931, %v1913, 0
      %v2005 = vsel %vm1931, %v1914, 0
      %v2008 = vsel %vm1931, %v1915, 0
      %v2011 = vsel %vm1931, %v1916, 0
      %v2014 = vsel %vm1931, %v1917, 0
      %v2017 = vsel %vm1931, %v1918, 0
      %v2020 = vsel %vm1931, %v1919, 0
      %v2023 = vsel %vm1931, %v1920, 0
      %v2026 = vsel %vm1931, %v1921, 0
      %vm2028 = vcmask 1043456
      %v2030 = vsel %vm2028, %v1926, 0
      %2032 = vmatpush.msra.mxu0 0.0
      %2033 = vmatpush.msra.mxu0 0.0
      %2034 = vmatpush.msra.mxu0 0.0
      %2035 = vmatpush.msra.mxu0 0.0
      %2036 = vmatpush.msra.mxu0 0.0
      %2037 = vmatpush.msra.mxu0 0.0
      %2038 = vmatpush.msra.mxu0 0.0
      %2039 = vmatpush.msra.mxu0 0.0
      %2040 = vmatpush.msra.mxu0 0.0
      %2041 = vmatpush.msra.mxu0 0.0
      %2042 = vmatpush.msra.mxu0 0.0
      %2043 = vmatpush.msra.mxu0 %v2030
      %2044 = vmatpush.msra.mxu0 %v1925
      %2045 = vmatpush.msra.mxu0 %v1924
      %2046 = vmatpush.msra.mxu0 %v1923
      %2047 = vmatpush.msra.mxu0 %v1922
      %2048 = vmatmul.f32.gmra.mxu0 %v1933
      %v2049 = vpop.f32.mrf.mxu0
      %v2050 = vadd.f32 %v1929, %v2049
      %2051 = vmatmul.f32.gmra.mxu0 %v1936
      %v2052 = vpop.f32.mrf.mxu0
      %v2053 = vadd.f32 %v1929, %v2052
      %2054 = vmatmul.f32.gmra.mxu0 %v1939
      %v2055 = vpop.f32.mrf.mxu0
      %v2056 = vadd.f32 %v1929, %v2055
      %2057 = vmatmul.f32.gmra.mxu0 %v1942
      %v2058 = vpop.f32.mrf.mxu0
      %v2059 = vadd.f32 %v1929, %v2058
      %2060 = vmatmul.f32.gmra.mxu0 %v1945
      %v2061 = vpop.f32.mrf.mxu0
      %v2062 = vadd.f32 %v1929, %v2061
      %2063 = vmatmul.f32.gmra.mxu0 %v1948
      %v2064 = vpop.f32.mrf.mxu0
      %v2065 = vadd.f32 %v1929, %v2064
      %2066 = vmatmul.f32.gmra.mxu0 %v1951
      %v2067 = vpop.f32.mrf.mxu0
      %v2068 = vadd.f32 %v1929, %v2067
      %2069 = vmatmul.f32.gmra.mxu0 %v1954
      %v2070 = vpop.f32.mrf.mxu0
      %v2071 = vadd.f32 %v1929, %v2070
      %2072 = vmatmul.f32.gmra.mxu0 %v1957
      %v2073 = vpop.f32.mrf.mxu0
      %v2074 = vadd.f32 %v1929, %v2073
      %2075 = vmatmul.f32.gmra.mxu0 %v1960
      %v2076 = vpop.f32.mrf.mxu0
      %v2077 = vadd.f32 %v1929, %v2076
      %2078 = vmatmul.f32.gmra.mxu0 %v1963
      %v2079 = vpop.f32.mrf.mxu0
      %v2080 = vadd.f32 %v1929, %v2079
      %2081 = vmatmul.f32.gmra.mxu0 %v1966
      %v2082 = vpop.f32.mrf.mxu0
      %v2083 = vadd.f32 %v1929, %v2082
      %2084 = vmatmul.f32.gmra.mxu0 %v1969
      %v2085 = vpop.f32.mrf.mxu0
      %v2086 = vadd.f32 %v1929, %v2085
      %2087 = vmatmul.f32.gmra.mxu0 %v1972
      %v2088 = vpop.f32.mrf.mxu0
      %v2089 = vadd.f32 %v1929, %v2088
      %2090 = vmatmul.f32.gmra.mxu0 %v1975
      %v2091 = vpop.f32.mrf.mxu0
      %v2092 = vadd.f32 %v1929, %v2091
      %2093 = vmatmul.f32.gmra.mxu0 %v1978
      %v2094 = vpop.f32.mrf.mxu0
      %v2095 = vadd.f32 %v1929, %v2094
      %2096 = vmatmul.f32.gmra.mxu0 %v1981
      %v2097 = vpop.f32.mrf.mxu0
      %v2098 = vadd.f32 %v1929, %v2097
      %2099 = vmatmul.f32.gmra.mxu0 %v1984
      %v2100 = vpop.f32.mrf.mxu0
      %v2101 = vadd.f32 %v1929, %v2100
      %2102 = vmatmul.f32.gmra.mxu0 %v1987
      %v2103 = vpop.f32.mrf.mxu0
      %v2104 = vadd.f32 %v1929, %v2103
      %2105 = vmatmul.f32.gmra.mxu0 %v1990
      %v2106 = vpop.f32.mrf.mxu0
      %v2107 = vadd.f32 %v1929, %v2106
      %2108 = vmatmul.f32.gmra.mxu0 %v1993
      %v2109 = vpop.f32.mrf.mxu0
      %v2110 = vadd.f32 %v1929, %v2109
      %2111 = vmatmul.f32.gmra.mxu0 %v1996
      %v2112 = vpop.f32.mrf.mxu0
      %v2113 = vadd.f32 %v1929, %v2112
      %2114 = vmatmul.f32.gmra.mxu0 %v1999
      %v2115 = vpop.f32.mrf.mxu0
      %v2116 = vadd.f32 %v1929, %v2115
      %2117 = vmatmul.f32.gmra.mxu0 %v2002
      %v2118 = vpop.f32.mrf.mxu0
      %v2119 = vadd.f32 %v1929, %v2118
      %2120 = vmatmul.f32.gmra.mxu0 %v2005
      %v2121 = vpop.f32.mrf.mxu0
      %v2122 = vadd.f32 %v1929, %v2121
      %2123 = vmatmul.f32.gmra.mxu0 %v2008
      %v2124 = vpop.f32.mrf.mxu0
      %v2125 = vadd.f32 %v1929, %v2124
      %2126 = vmatmul.f32.gmra.mxu0 %v2011
      %v2127 = vpop.f32.mrf.mxu0
      %v2128 = vadd.f32 %v1929, %v2127
      %2129 = vmatmul.f32.gmra.mxu0 %v2014
      %v2130 = vpop.f32.mrf.mxu0
      %v2131 = vadd.f32 %v1929, %v2130
      %2132 = vmatmul.f32.gmra.mxu0 %v2017
      %v2133 = vpop.f32.mrf.mxu0
      %v2134 = vadd.f32 %v1929, %v2133
      %2135 = vmatmul.f32.gmra.mxu0 %v2020
      %v2136 = vpop.f32.mrf.mxu0
      %v2137 = vadd.f32 %v1929, %v2136
      %2138 = vmatmul.f32.gmra.mxu0 %v2023
      %v2139 = vpop.f32.mrf.mxu0
      %v2140 = vadd.f32 %v1929, %v2139
      %2141 = vmatmul.f32.gmra.mxu0 %v2026
      %v2142 = vpop.f32.mrf.mxu0
      %v2143 = vadd.f32 %v1929, %v2142
      %2144 = vdwg.mxu0
      %v2145 = vmax.f32 %v2050, 0.0
      %v2146 = vmax.f32 %v2053, 0.0
      %v2147 = vmax.f32 %v2056, 0.0
      %v2148 = vmax.f32 %v2059, 0.0
      %v2149 = vmax.f32 %v2062, 0.0
      %v2150 = vmax.f32 %v2065, 0.0
      %v2151 = vmax.f32 %v2068, 0.0
      %v2152 = vmax.f32 %v2071, 0.0
      %v2153 = vmax.f32 %v2074, 0.0
      %v2154 = vmax.f32 %v2077, 0.0
      %v2155 = vmax.f32 %v2080, 0.0
      %v2156 = vmax.f32 %v2083, 0.0
      %v2157 = vmax.f32 %v2086, 0.0
      %v2158 = vmax.f32 %v2089, 0.0
      %v2159 = vmax.f32 %v2092, 0.0
      %v2160 = vmax.f32 %v2095, 0.0
      %v2161 = vmax.f32 %v2098, 0.0
      %v2162 = vmax.f32 %v2101, 0.0
      %v2163 = vmax.f32 %v2104, 0.0
      %v2164 = vmax.f32 %v2107, 0.0
      %v2165 = vmax.f32 %v2110, 0.0
      %v2166 = vmax.f32 %v2113, 0.0
      %v2167 = vmax.f32 %v2116, 0.0
      %v2168 = vmax.f32 %v2119, 0.0
      %v2169 = vmax.f32 %v2122, 0.0
      %v2170 = vmax.f32 %v2125, 0.0
      %v2171 = vmax.f32 %v2128, 0.0
      %v2172 = vmax.f32 %v2131, 0.0
      %v2173 = vmax.f32 %v2134, 0.0
      %v2174 = vmax.f32 %v2137, 0.0
      %v2175 = vmax.f32 %v2140, 0.0
      %v2176 = vmax.f32 %v2143, 0.0
      %2177 = vst.msk [vmem:[#allocation3] sm:$0xff] %vm1691, 0.0
      %2178 = vst.msk [vmem:[#allocation3 + $0x8] sm:$0xff] %vm1691, 0.0
      %vm2179 = vcmask 57344
      %2180 = vst.msk [vmem:[#allocation3 + $0x10] sm:$0x1] %vm2179, 0.0
      %2181 = vst.msk [vmem:[#allocation3 + $0x18] sm:$0xff] %vm1691, 0.0
      %2182 = vst.msk [vmem:[#allocation3 + $0x20] sm:$0xff] %vm1691, 0.0
      %2183 = vst.msk [vmem:[#allocation3 + $0x28] sm:$0x1] %vm2179, 0.0
      %2184 = vst.msk [vmem:[#allocation3 + $0x30] sm:$0xff] %vm1691, 0.0
      %2185 = vst.msk [vmem:[#allocation3 + $0x38] sm:$0xff] %vm1691, 0.0
      %2186 = vst.msk [vmem:[#allocation3 + $0x40] sm:$0x1] %vm2179, 0.0
      %2187 = vst.msk [vmem:[#allocation3 + $0x48] sm:$0xff] %vm1691, 0.0
      %2188 = vst.msk [vmem:[#allocation3 + $0x50] sm:$0xff] %vm1691, 0.0
      %2189 = vst.msk [vmem:[#allocation3 + $0x58] sm:$0x1] %vm2179, 0.0
      %2190 = vst.msk [vmem:[#allocation3 + $0x60] sm:$0xff] %vm1691, 0.0
      %2191 = vst.msk [vmem:[#allocation3 + $0x68] sm:$0xff] %vm1691, 0.0
      %2192 = vst.msk [vmem:[#allocation3 + $0x70] sm:$0x1] %vm2179, 0.0
      %2193 = vst.msk [vmem:[#allocation3 + $0x78] sm:$0xff] %vm1691, 0.0
      %2194 = vst.msk [vmem:[#allocation3 + $0x80] sm:$0xff] %vm1691, 0.0
      %2195 = vst.msk [vmem:[#allocation3 + $0x88] sm:$0x1] %vm2179, 0.0
      %2196 = vst.msk [vmem:[#allocation3 + $0x90] sm:$0xff] %vm1691, 0.0
      %2197 = vst.msk [vmem:[#allocation3 + $0x98] sm:$0xff] %vm1691, 0.0
      %2198 = vst.msk [vmem:[#allocation3 + $0xa0] sm:$0x1] %vm2179, 0.0
      %2199 = vst.msk [vmem:[#allocation3 + $0xa8] sm:$0xff] %vm1691, 0.0
      %2200 = vst.msk [vmem:[#allocation3 + $0xb0] sm:$0xff] %vm1691, 0.0
      %2201 = vst.msk [vmem:[#allocation3 + $0xb8] sm:$0x1] %vm2179, 0.0
      %2202 = vst.msk [vmem:[#allocation3 + $0xc0] sm:$0xff] %vm1691, 0.0
      %2203 = vst.msk [vmem:[#allocation3 + $0xc8] sm:$0xff] %vm1691, 0.0
      %2204 = vst.msk [vmem:[#allocation3 + $0xd0] sm:$0x1] %vm2179, 0.0
      %2205 = vst.msk [vmem:[#allocation3 + $0xd8] sm:$0xff] %vm1691, 0.0
      %2206 = vst.msk [vmem:[#allocation3 + $0xe0] sm:$0xff] %vm1691, 0.0
      %2207 = vst.msk [vmem:[#allocation3 + $0xe8] sm:$0x1] %vm2179, 0.0
      %2208 = vst.msk [vmem:[#allocation3 + $0xf0] sm:$0xff] %vm1691, 0.0
      %2209 = vst.msk [vmem:[#allocation3 + $0xf8] sm:$0xff] %vm1691, 0.0
      %2210 = vst.msk [vmem:[#allocation3 + $0x100] sm:$0x1] %vm2179, 0.0
      %2211 = vst.msk [vmem:[#allocation3 + $0x108] sm:$0xff] %vm1691, 0.0
      %2212 = vst.msk [vmem:[#allocation3 + $0x110] sm:$0xff] %vm1691, 0.0
      %2213 = vst.msk [vmem:[#allocation3 + $0x118] sm:$0x1] %vm2179, 0.0
      %2214 = vst.msk [vmem:[#allocation3 + $0x120] sm:$0xff] %vm1691, 0.0
      %2215 = vst.msk [vmem:[#allocation3 + $0x128] sm:$0xff] %vm1691, 0.0
      %2216 = vst.msk [vmem:[#allocation3 + $0x130] sm:$0x1] %vm2179, 0.0
      %2217 = vst.msk [vmem:[#allocation3 + $0x138] sm:$0xff] %vm1691, 0.0
      %2218 = vst.msk [vmem:[#allocation3 + $0x140] sm:$0xff] %vm1691, 0.0
      %2219 = vst.msk [vmem:[#allocation3 + $0x148] sm:$0x1] %vm2179, 0.0
      %2220 = vst.msk [vmem:[#allocation3 + $0x150] sm:$0xff] %vm1691, 0.0
      %2221 = vst.msk [vmem:[#allocation3 + $0x158] sm:$0xff] %vm1691, 0.0
      %2222 = vst.msk [vmem:[#allocation3 + $0x160] sm:$0x1] %vm2179, 0.0
      %2223 = vst.msk [vmem:[#allocation3 + $0x168] sm:$0xff] %vm1691, 0.0
      %2224 = vst.msk [vmem:[#allocation3 + $0x170] sm:$0xff] %vm1691, 0.0
      %2225 = vst.msk [vmem:[#allocation3 + $0x178] sm:$0x1] %vm2179, 0.0
      %2226 = vst.msk [vmem:[#allocation3 + $0x180] sm:$0xff] %vm1691, 0.0
      %2227 = vst.msk [vmem:[#allocation3 + $0x188] sm:$0xff] %vm1691, 0.0
      %2228 = vst.msk [vmem:[#allocation3 + $0x190] sm:$0x1] %vm2179, 0.0
      %2229 = vst.msk [vmem:[#allocation3] sm:$0xff] %vm1691, %v2145
      %2230 = vst.msk [vmem:[#allocation3 + $0x8] sm:$0xff] %vm1691, %v2146
      %2231 = vst.msk [vmem:[#allocation3 + $0x18] sm:$0xff] %vm1691, %v2147
      %2232 = vst.msk [vmem:[#allocation3 + $0x20] sm:$0xff] %vm1691, %v2148
      %2233 = vst.msk [vmem:[#allocation3 + $0x30] sm:$0xff] %vm1691, %v2149
      %2234 = vst.msk [vmem:[#allocation3 + $0x38] sm:$0xff] %vm1691, %v2150
      %2235 = vst.msk [vmem:[#allocation3 + $0x48] sm:$0xff] %vm1691, %v2151
      %2236 = vst.msk [vmem:[#allocation3 + $0x50] sm:$0xff] %vm1691, %v2152
      %2237 = vst.msk [vmem:[#allocation3 + $0x60] sm:$0xff] %vm1691, %v2153
      %2238 = vst.msk [vmem:[#allocation3 + $0x68] sm:$0xff] %vm1691, %v2154
      %2239 = vst.msk [vmem:[#allocation3 + $0x78] sm:$0xff] %vm1691, %v2155
      %2240 = vst.msk [vmem:[#allocation3 + $0x80] sm:$0xff] %vm1691, %v2156
      %2241 = vst.msk [vmem:[#allocation3 + $0x90] sm:$0xff] %vm1691, %v2157
      %2242 = vst.msk [vmem:[#allocation3 + $0x98] sm:$0xff] %vm1691, %v2158
      %2243 = vst.msk [vmem:[#allocation3 + $0xa8] sm:$0xff] %vm1691, %v2159
      %2244 = vst.msk [vmem:[#allocation3 + $0xb0] sm:$0xff] %vm1691, %v2160
      %2245 = vst.msk [vmem:[#allocation3 + $0xc0] sm:$0xff] %vm1691, %v2161
      %2246 = vst.msk [vmem:[#allocation3 + $0xc8] sm:$0xff] %vm1691, %v2162
      %2247 = vst.msk [vmem:[#allocation3 + $0xd8] sm:$0xff] %vm1691, %v2163
      %2248 = vst.msk [vmem:[#allocation3 + $0xe0] sm:$0xff] %vm1691, %v2164
      %2249 = vst.msk [vmem:[#allocation3 + $0xf0] sm:$0xff] %vm1691, %v2165
      %2250 = vst.msk [vmem:[#allocation3 + $0xf8] sm:$0xff] %vm1691, %v2166
      %2251 = vst.msk [vmem:[#allocation3 + $0x108] sm:$0xff] %vm1691, %v2167
      %2252 = vst.msk [vmem:[#allocation3 + $0x110] sm:$0xff] %vm1691, %v2168
      %2253 = vst.msk [vmem:[#allocation3 + $0x120] sm:$0xff] %vm1691, %v2169
      %2254 = vst.msk [vmem:[#allocation3 + $0x128] sm:$0xff] %vm1691, %v2170
      %2255 = vst.msk [vmem:[#allocation3 + $0x138] sm:$0xff] %vm1691, %v2171
      %2256 = vst.msk [vmem:[#allocation3 + $0x140] sm:$0xff] %vm1691, %v2172
      %2257 = vst.msk [vmem:[#allocation3 + $0x150] sm:$0xff] %vm1691, %v2173
      %2258 = vst.msk [vmem:[#allocation3 + $0x158] sm:$0xff] %vm1691, %v2174
      %2259 = vst.msk [vmem:[#allocation3 + $0x168] sm:$0xff] %vm1691, %v2175
      %2260 = vst.msk [vmem:[#allocation3 + $0x170] sm:$0xff] %vm1691, %v2176
      %v2261 = vld [vmem:[#allocation3 + $0x1] sm:$0xff]
      %v2262 = vld [vmem:[#allocation3 + $0x9] sm:$0xff]
      %v2263 = vld [vmem:[#allocation3 + $0x19] sm:$0xff]
      %v2264 = vld [vmem:[#allocation3 + $0x21] sm:$0xff]
      %v2265 = vld [vmem:[#allocation3 + $0x31] sm:$0xff]
      %v2266 = vld [vmem:[#allocation3 + $0x39] sm:$0xff]
      %v2267 = vld [vmem:[#allocation3 + $0x49] sm:$0xff]
      %v2268 = vld [vmem:[#allocation3 + $0x51] sm:$0xff]
      %v2269 = vld [vmem:[#allocation3 + $0x61] sm:$0xff]
      %v2270 = vld [vmem:[#allocation3 + $0x69] sm:$0xff]
      %v2271 = vld [vmem:[#allocation3 + $0x79] sm:$0xff]
      %v2272 = vld [vmem:[#allocation3 + $0x81] sm:$0xff]
      %v2273 = vld [vmem:[#allocation3 + $0x91] sm:$0xff]
      %v2274 = vld [vmem:[#allocation3 + $0x99] sm:$0xff]
      %v2275 = vld [vmem:[#allocation3 + $0xa9] sm:$0xff]
      %v2276 = vld [vmem:[#allocation3 + $0xb1] sm:$0xff]
      %v2277 = vld [vmem:[#allocation3 + $0xc1] sm:$0xff]
      %v2278 = vld [vmem:[#allocation3 + $0xc9] sm:$0xff]
      %v2279 = vld [vmem:[#allocation3 + $0xd9] sm:$0xff]
      %v2280 = vld [vmem:[#allocation3 + $0xe1] sm:$0xff]
      %v2281 = vld [vmem:[#allocation3 + $0xf1] sm:$0xff]
      %v2282 = vld [vmem:[#allocation3 + $0xf9] sm:$0xff]
      %v2283 = vld [vmem:[#allocation3 + $0x109] sm:$0xff]
      %v2284 = vld [vmem:[#allocation3 + $0x111] sm:$0xff]
      %v2285 = vld [vmem:[#allocation3 + $0x121] sm:$0xff]
      %v2286 = vld [vmem:[#allocation3 + $0x129] sm:$0xff]
      %v2287 = vld [vmem:[#allocation3 + $0x139] sm:$0xff]
      %v2288 = vld [vmem:[#allocation3 + $0x141] sm:$0xff]
      %v2289 = vld [vmem:[#allocation3 + $0x151] sm:$0xff]
      %v2290 = vld [vmem:[#allocation3 + $0x159] sm:$0xff]
      %v2291 = vld [vmem:[#allocation3 + $0x169] sm:$0xff]
      %v2292 = vld [vmem:[#allocation3 + $0x171] sm:$0xff]
      %s2293 = scalar_lea.vmem [#allocation3], 24
      %v2294 = vld [vmem:[%s2293] sm:$0xff]
      %v2295 = vld [vmem:[%s2293 + $0x8] sm:$0xff]
      %v2296 = vld [vmem:[%s2293 + $0x18] sm:$0xff]
      %v2297 = vld [vmem:[%s2293 + $0x20] sm:$0xff]
      %v2298 = vld [vmem:[%s2293 + $0x30] sm:$0xff]
      %v2299 = vld [vmem:[%s2293 + $0x38] sm:$0xff]
      %v2300 = vld [vmem:[%s2293 + $0x48] sm:$0xff]
      %v2301 = vld [vmem:[%s2293 + $0x50] sm:$0xff]
      %v2302 = vld [vmem:[%s2293 + $0x60] sm:$0xff]
      %v2303 = vld [vmem:[%s2293 + $0x68] sm:$0xff]
      %v2304 = vld [vmem:[%s2293 + $0x78] sm:$0xff]
      %v2305 = vld [vmem:[%s2293 + $0x80] sm:$0xff]
      %v2306 = vld [vmem:[%s2293 + $0x90] sm:$0xff]
      %v2307 = vld [vmem:[%s2293 + $0x98] sm:$0xff]
      %v2308 = vld [vmem:[%s2293 + $0xa8] sm:$0xff]
      %v2309 = vld [vmem:[%s2293 + $0xb0] sm:$0xff]
      %v2310 = vld [vmem:[%s2293 + $0xc0] sm:$0xff]
      %v2311 = vld [vmem:[%s2293 + $0xc8] sm:$0xff]
      %v2312 = vld [vmem:[%s2293 + $0xd8] sm:$0xff]
      %v2313 = vld [vmem:[%s2293 + $0xe0] sm:$0xff]
      %v2314 = vld [vmem:[%s2293 + $0xf0] sm:$0xff]
      %v2315 = vld [vmem:[%s2293 + $0xf8] sm:$0xff]
      %v2316 = vld [vmem:[%s2293 + $0x108] sm:$0xff]
      %v2317 = vld [vmem:[%s2293 + $0x110] sm:$0xff]
      %v2318 = vld [vmem:[%s2293 + $0x120] sm:$0xff]
      %v2319 = vld [vmem:[%s2293 + $0x128] sm:$0xff]
      %v2320 = vld [vmem:[%s2293 + $0x138] sm:$0xff]
      %v2321 = vld [vmem:[%s2293 + $0x140] sm:$0xff]
      %v2322 = vld [vmem:[%s2293 + $0x150] sm:$0xff]
      %v2323 = vld [vmem:[%s2293 + $0x158] sm:$0xff]
      %v2324 = vld [vmem:[%s2293 + $0x168] sm:$0xff]
      %v2325 = vld [vmem:[%s2293 + $0x170] sm:$0xff]
      %v2326 = vld [vmem:[%s2293 + $0x1] sm:$0xff]
      %v2327 = vld [vmem:[%s2293 + $0x9] sm:$0xff]
      %v2328 = vld [vmem:[%s2293 + $0x19] sm:$0xff]
      %v2329 = vld [vmem:[%s2293 + $0x21] sm:$0xff]
      %v2330 = vld [vmem:[%s2293 + $0x31] sm:$0xff]
      %v2331 = vld [vmem:[%s2293 + $0x39] sm:$0xff]
      %v2332 = vld [vmem:[%s2293 + $0x49] sm:$0xff]
      %v2333 = vld [vmem:[%s2293 + $0x51] sm:$0xff]
      %v2334 = vld [vmem:[%s2293 + $0x61] sm:$0xff]
      %v2335 = vld [vmem:[%s2293 + $0x69] sm:$0xff]
      %v2336 = vld [vmem:[%s2293 + $0x79] sm:$0xff]
      %v2337 = vld [vmem:[%s2293 + $0x81] sm:$0xff]
      %v2338 = vld [vmem:[%s2293 + $0x91] sm:$0xff]
      %v2339 = vld [vmem:[%s2293 + $0x99] sm:$0xff]
      %v2340 = vld [vmem:[%s2293 + $0xa9] sm:$0xff]
      %v2341 = vld [vmem:[%s2293 + $0xb1] sm:$0xff]
      %v2342 = vld [vmem:[%s2293 + $0xc1] sm:$0xff]
      %v2343 = vld [vmem:[%s2293 + $0xc9] sm:$0xff]
      %v2344 = vld [vmem:[%s2293 + $0xd9] sm:$0xff]
      %v2345 = vld [vmem:[%s2293 + $0xe1] sm:$0xff]
      %v2346 = vld [vmem:[%s2293 + $0xf1] sm:$0xff]
      %v2347 = vld [vmem:[%s2293 + $0xf9] sm:$0xff]
      %v2348 = vld [vmem:[%s2293 + $0x109] sm:$0xff]
      %v2349 = vld [vmem:[%s2293 + $0x111] sm:$0xff]
      %v2350 = vld [vmem:[%s2293 + $0x121] sm:$0xff]
      %v2351 = vld [vmem:[%s2293 + $0x129] sm:$0xff]
      %v2352 = vld [vmem:[%s2293 + $0x139] sm:$0xff]
      %v2353 = vld [vmem:[%s2293 + $0x141] sm:$0xff]
      %v2354 = vld [vmem:[%s2293 + $0x151] sm:$0xff]
      %v2355 = vld [vmem:[%s2293 + $0x159] sm:$0xff]
      %v2356 = vld [vmem:[%s2293 + $0x169] sm:$0xff]
      %v2357 = vld [vmem:[%s2293 + $0x171] sm:$0xff]
      %2390 = vrot.lane.b32.xlu0 %v2261, 8
      %v2391 = vpop.permute.xlu0 %2390
      %2392 = vrot.lane.b32.xlu0 %v2262, 8
      %v2393 = vpop.permute.xlu0 %2392
      %2394 = vrot.lane.b32.xlu0 %v2263, 8
      %v2395 = vpop.permute.xlu0 %2394
      %2396 = vrot.lane.b32.xlu0 %v2264, 8
      %v2397 = vpop.permute.xlu0 %2396
      %2398 = vrot.lane.b32.xlu0 %v2265, 8
      %v2399 = vpop.permute.xlu0 %2398
      %2400 = vrot.lane.b32.xlu0 %v2266, 8
      %v2401 = vpop.permute.xlu0 %2400
      %2402 = vrot.lane.b32.xlu0 %v2267, 8
      %v2403 = vpop.permute.xlu0 %2402
      %2404 = vrot.lane.b32.xlu0 %v2268, 8
      %v2405 = vpop.permute.xlu0 %2404
      %2406 = vrot.lane.b32.xlu0 %v2269, 8
      %v2407 = vpop.permute.xlu0 %2406
      %2408 = vrot.lane.b32.xlu0 %v2270, 8
      %v2409 = vpop.permute.xlu0 %2408
      %2410 = vrot.lane.b32.xlu0 %v2271, 8
      %v2411 = vpop.permute.xlu0 %2410
      %2412 = vrot.lane.b32.xlu0 %v2272, 8
      %v2413 = vpop.permute.xlu0 %2412
      %2414 = vrot.lane.b32.xlu0 %v2273, 8
      %v2415 = vpop.permute.xlu0 %2414
      %2416 = vrot.lane.b32.xlu0 %v2274, 8
      %v2417 = vpop.permute.xlu0 %2416
      %2418 = vrot.lane.b32.xlu0 %v2275, 8
      %v2419 = vpop.permute.xlu0 %2418
      %2420 = vrot.lane.b32.xlu0 %v2276, 8
      %v2421 = vpop.permute.xlu0 %2420
      %2422 = vrot.lane.b32.xlu0 %v2277, 8
      %v2423 = vpop.permute.xlu0 %2422
      %2424 = vrot.lane.b32.xlu0 %v2278, 8
      %v2425 = vpop.permute.xlu0 %2424
      %2426 = vrot.lane.b32.xlu0 %v2279, 8
      %v2427 = vpop.permute.xlu0 %2426
      %2428 = vrot.lane.b32.xlu0 %v2280, 8
      %v2429 = vpop.permute.xlu0 %2428
      %2430 = vrot.lane.b32.xlu0 %v2281, 8
      %v2431 = vpop.permute.xlu0 %2430
      %2432 = vrot.lane.b32.xlu0 %v2282, 8
      %v2433 = vpop.permute.xlu0 %2432
      %2434 = vrot.lane.b32.xlu0 %v2283, 8
      %v2435 = vpop.permute.xlu0 %2434
      %2436 = vrot.lane.b32.xlu0 %v2284, 8
      %v2437 = vpop.permute.xlu0 %2436
      %2438 = vrot.lane.b32.xlu0 %v2285, 8
      %v2439 = vpop.permute.xlu0 %2438
      %2440 = vrot.lane.b32.xlu0 %v2286, 8
      %v2441 = vpop.permute.xlu0 %2440
      %2442 = vrot.lane.b32.xlu0 %v2287, 8
      %v2443 = vpop.permute.xlu0 %2442
      %2444 = vrot.lane.b32.xlu0 %v2288, 8
      %v2445 = vpop.permute.xlu0 %2444
      %2446 = vrot.lane.b32.xlu0 %v2289, 8
      %v2447 = vpop.permute.xlu0 %2446
      %2448 = vrot.lane.b32.xlu0 %v2290, 8
      %v2449 = vpop.permute.xlu0 %2448
      %2450 = vrot.lane.b32.xlu0 %v2291, 8
      %v2451 = vpop.permute.xlu0 %2450
      %2452 = vrot.lane.b32.xlu0 %v2292, 8
      %v2453 = vpop.permute.xlu0 %2452
      %2518 = vrot.lane.b32.xlu0 %v2294, 16
      %v2519 = vpop.permute.xlu0 %2518
      %2520 = vrot.lane.b32.xlu0 %v2295, 16
      %v2521 = vpop.permute.xlu0 %2520
      %2522 = vrot.lane.b32.xlu0 %v2296, 16
      %v2523 = vpop.permute.xlu0 %2522
      %2524 = vrot.lane.b32.xlu0 %v2297, 16
      %v2525 = vpop.permute.xlu0 %2524
      %2526 = vrot.lane.b32.xlu0 %v2298, 16
      %v2527 = vpop.permute.xlu0 %2526
      %2528 = vrot.lane.b32.xlu0 %v2299, 16
      %v2529 = vpop.permute.xlu0 %2528
      %2530 = vrot.lane.b32.xlu0 %v2300, 16
      %v2531 = vpop.permute.xlu0 %2530
      %2532 = vrot.lane.b32.xlu0 %v2301, 16
      %v2533 = vpop.permute.xlu0 %2532
      %2534 = vrot.lane.b32.xlu0 %v2302, 16
      %v2535 = vpop.permute.xlu0 %2534
      %2536 = vrot.lane.b32.xlu0 %v2303, 16
      %v2537 = vpop.permute.xlu0 %2536
      %2538 = vrot.lane.b32.xlu0 %v2304, 16
      %v2539 = vpop.permute.xlu0 %2538
      %2540 = vrot.lane.b32.xlu0 %v2305, 16
      %v2541 = vpop.permute.xlu0 %2540
      %2542 = vrot.lane.b32.xlu0 %v2306, 16
      %v2543 = vpop.permute.xlu0 %2542
      %2544 = vrot.lane.b32.xlu0 %v2307, 16
      %v2545 = vpop.permute.xlu0 %2544
      %2546 = vrot.lane.b32.xlu0 %v2308, 16
      %v2547 = vpop.permute.xlu0 %2546
      %2548 = vrot.lane.b32.xlu0 %v2309, 16
      %v2549 = vpop.permute.xlu0 %2548
      %2550 = vrot.lane.b32.xlu0 %v2310, 16
      %v2551 = vpop.permute.xlu0 %2550
      %2552 = vrot.lane.b32.xlu0 %v2311, 16
      %v2553 = vpop.permute.xlu0 %2552
      %2554 = vrot.lane.b32.xlu0 %v2312, 16
      %v2555 = vpop.permute.xlu0 %2554
      %2556 = vrot.lane.b32.xlu0 %v2313, 16
      %v2557 = vpop.permute.xlu0 %2556
      %2558 = vrot.lane.b32.xlu0 %v2314, 16
      %v2559 = vpop.permute.xlu0 %2558
      %2560 = vrot.lane.b32.xlu0 %v2315, 16
      %v2561 = vpop.permute.xlu0 %2560
      %2562 = vrot.lane.b32.xlu0 %v2316, 16
      %v2563 = vpop.permute.xlu0 %2562
      %2564 = vrot.lane.b32.xlu0 %v2317, 16
      %v2565 = vpop.permute.xlu0 %2564
      %2566 = vrot.lane.b32.xlu0 %v2318, 16
      %v2567 = vpop.permute.xlu0 %2566
      %2568 = vrot.lane.b32.xlu0 %v2319, 16
      %v2569 = vpop.permute.xlu0 %2568
      %2570 = vrot.lane.b32.xlu0 %v2320, 16
      %v2571 = vpop.permute.xlu0 %2570
      %2572 = vrot.lane.b32.xlu0 %v2321, 16
      %v2573 = vpop.permute.xlu0 %2572
      %2574 = vrot.lane.b32.xlu0 %v2322, 16
      %v2575 = vpop.permute.xlu0 %2574
      %2576 = vrot.lane.b32.xlu0 %v2323, 16
      %v2577 = vpop.permute.xlu0 %2576
      %2578 = vrot.lane.b32.xlu0 %v2324, 16
      %v2579 = vpop.permute.xlu0 %2578
      %2580 = vrot.lane.b32.xlu0 %v2325, 16
      %v2581 = vpop.permute.xlu0 %2580
      %2646 = vrot.lane.b32.xlu0 %v2326, 24
      %v2647 = vpop.permute.xlu0 %2646
      %2648 = vrot.lane.b32.xlu0 %v2327, 24
      %v2649 = vpop.permute.xlu0 %2648
      %2650 = vrot.lane.b32.xlu0 %v2328, 24
      %v2651 = vpop.permute.xlu0 %2650
      %2652 = vrot.lane.b32.xlu0 %v2329, 24
      %v2653 = vpop.permute.xlu0 %2652
      %2654 = vrot.lane.b32.xlu0 %v2330, 24
      %v2655 = vpop.permute.xlu0 %2654
      %2656 = vrot.lane.b32.xlu0 %v2331, 24
      %v2657 = vpop.permute.xlu0 %2656
      %2658 = vrot.lane.b32.xlu0 %v2332, 24
      %v2659 = vpop.permute.xlu0 %2658
      %2660 = vrot.lane.b32.xlu0 %v2333, 24
      %v2661 = vpop.permute.xlu0 %2660
      %2662 = vrot.lane.b32.xlu0 %v2334, 24
      %v2663 = vpop.permute.xlu0 %2662
      %2664 = vrot.lane.b32.xlu0 %v2335, 24
      %v2665 = vpop.permute.xlu0 %2664
      %2666 = vrot.lane.b32.xlu0 %v2336, 24
      %v2667 = vpop.permute.xlu0 %2666
      %2668 = vrot.lane.b32.xlu0 %v2337, 24
      %v2669 = vpop.permute.xlu0 %2668
      %2670 = vrot.lane.b32.xlu0 %v2338, 24
      %v2671 = vpop.permute.xlu0 %2670
      %2672 = vrot.lane.b32.xlu0 %v2339, 24
      %v2673 = vpop.permute.xlu0 %2672
      %2674 = vrot.lane.b32.xlu0 %v2340, 24
      %v2675 = vpop.permute.xlu0 %2674
      %2676 = vrot.lane.b32.xlu0 %v2341, 24
      %v2677 = vpop.permute.xlu0 %2676
      %2678 = vrot.lane.b32.xlu0 %v2342, 24
      %v2679 = vpop.permute.xlu0 %2678
      %2680 = vrot.lane.b32.xlu0 %v2343, 24
      %v2681 = vpop.permute.xlu0 %2680
      %2682 = vrot.lane.b32.xlu0 %v2344, 24
      %v2683 = vpop.permute.xlu0 %2682
      %2684 = vrot.lane.b32.xlu0 %v2345, 24
      %v2685 = vpop.permute.xlu0 %2684
      %2686 = vrot.lane.b32.xlu0 %v2346, 24
      %v2687 = vpop.permute.xlu0 %2686
      %2688 = vrot.lane.b32.xlu0 %v2347, 24
      %v2689 = vpop.permute.xlu0 %2688
      %2690 = vrot.lane.b32.xlu0 %v2348, 24
      %v2691 = vpop.permute.xlu0 %2690
      %2692 = vrot.lane.b32.xlu0 %v2349, 24
      %v2693 = vpop.permute.xlu0 %2692
      %2694 = vrot.lane.b32.xlu0 %v2350, 24
      %v2695 = vpop.permute.xlu0 %2694
      %2696 = vrot.lane.b32.xlu0 %v2351, 24
      %v2697 = vpop.permute.xlu0 %2696
      %2698 = vrot.lane.b32.xlu0 %v2352, 24
      %v2699 = vpop.permute.xlu0 %2698
      %2700 = vrot.lane.b32.xlu0 %v2353, 24
      %v2701 = vpop.permute.xlu0 %2700
      %2702 = vrot.lane.b32.xlu0 %v2354, 24
      %v2703 = vpop.permute.xlu0 %2702
      %2704 = vrot.lane.b32.xlu0 %v2355, 24
      %v2705 = vpop.permute.xlu0 %2704
      %2706 = vrot.lane.b32.xlu0 %v2356, 24
      %v2707 = vpop.permute.xlu0 %2706
      %2708 = vrot.lane.b32.xlu0 %v2357, 24
      %v2709 = vpop.permute.xlu0 %2708
      %v2742 = vsel %vm1691, %v2145, %v2391
      %v2743 = vsel %vm1691, %v2146, %v2393
      %v2744 = vsel %vm1691, %v2147, %v2395
      %v2745 = vsel %vm1691, %v2148, %v2397
      %v2746 = vsel %vm1691, %v2149, %v2399
      %v2747 = vsel %vm1691, %v2150, %v2401
      %v2748 = vsel %vm1691, %v2151, %v2403
      %v2749 = vsel %vm1691, %v2152, %v2405
      %v2750 = vsel %vm1691, %v2153, %v2407
      %v2751 = vsel %vm1691, %v2154, %v2409
      %v2752 = vsel %vm1691, %v2155, %v2411
      %v2753 = vsel %vm1691, %v2156, %v2413
      %v2754 = vsel %vm1691, %v2157, %v2415
      %v2755 = vsel %vm1691, %v2158, %v2417
      %v2756 = vsel %vm1691, %v2159, %v2419
      %v2757 = vsel %vm1691, %v2160, %v2421
      %v2758 = vsel %vm1691, %v2161, %v2423
      %v2759 = vsel %vm1691, %v2162, %v2425
      %v2760 = vsel %vm1691, %v2163, %v2427
      %v2761 = vsel %vm1691, %v2164, %v2429
      %v2762 = vsel %vm1691, %v2165, %v2431
      %v2763 = vsel %vm1691, %v2166, %v2433
      %v2764 = vsel %vm1691, %v2167, %v2435
      %v2765 = vsel %vm1691, %v2168, %v2437
      %v2766 = vsel %vm1691, %v2169, %v2439
      %v2767 = vsel %vm1691, %v2170, %v2441
      %v2768 = vsel %vm1691, %v2171, %v2443
      %v2769 = vsel %vm1691, %v2172, %v2445
      %v2770 = vsel %vm1691, %v2173, %v2447
      %v2771 = vsel %vm1691, %v2174, %v2449
      %v2772 = vsel %vm1691, %v2175, %v2451
      %v2773 = vsel %vm1691, %v2176, %v2453
      %v2774 = vsel %vm1757, %v2742, %v2519
      %v2775 = vsel %vm1757, %v2743, %v2521
      %v2776 = vsel %vm1757, %v2744, %v2523
      %v2777 = vsel %vm1757, %v2745, %v2525
      %v2778 = vsel %vm1757, %v2746, %v2527
      %v2779 = vsel %vm1757, %v2747, %v2529
      %v2780 = vsel %vm1757, %v2748, %v2531
      %v2781 = vsel %vm1757, %v2749, %v2533
      %v2782 = vsel %vm1757, %v2750, %v2535
      %v2783 = vsel %vm1757, %v2751, %v2537
      %v2784 = vsel %vm1757, %v2752, %v2539
      %v2785 = vsel %vm1757, %v2753, %v2541
      %v2786 = vsel %vm1757, %v2754, %v2543
      %v2787 = vsel %vm1757, %v2755, %v2545
      %v2788 = vsel %vm1757, %v2756, %v2547
      %v2789 = vsel %vm1757, %v2757, %v2549
      %v2790 = vsel %vm1757, %v2758, %v2551
      %v2791 = vsel %vm1757, %v2759, %v2553
      %v2792 = vsel %vm1757, %v2760, %v2555
      %v2793 = vsel %vm1757, %v2761, %v2557
      %v2794 = vsel %vm1757, %v2762, %v2559
      %v2795 = vsel %vm1757, %v2763, %v2561
      %v2796 = vsel %vm1757, %v2764, %v2563
      %v2797 = vsel %vm1757, %v2765, %v2565
      %v2798 = vsel %vm1757, %v2766, %v2567
      %v2799 = vsel %vm1757, %v2767, %v2569
      %v2800 = vsel %vm1757, %v2768, %v2571
      %v2801 = vsel %vm1757, %v2769, %v2573
      %v2802 = vsel %vm1757, %v2770, %v2575
      %v2803 = vsel %vm1757, %v2771, %v2577
      %v2804 = vsel %vm1757, %v2772, %v2579
      %v2805 = vsel %vm1757, %v2773, %v2581
      %v2806 = vsel %vm1823, %v2774, %v2647
      %v2807 = vsel %vm1823, %v2775, %v2649
      %v2808 = vsel %vm1823, %v2776, %v2651
      %v2809 = vsel %vm1823, %v2777, %v2653
      %v2810 = vsel %vm1823, %v2778, %v2655
      %v2811 = vsel %vm1823, %v2779, %v2657
      %v2812 = vsel %vm1823, %v2780, %v2659
      %v2813 = vsel %vm1823, %v2781, %v2661
      %v2814 = vsel %vm1823, %v2782, %v2663
      %v2815 = vsel %vm1823, %v2783, %v2665
      %v2816 = vsel %vm1823, %v2784, %v2667
      %v2817 = vsel %vm1823, %v2785, %v2669
      %v2818 = vsel %vm1823, %v2786, %v2671
      %v2819 = vsel %vm1823, %v2787, %v2673
      %v2820 = vsel %vm1823, %v2788, %v2675
      %v2821 = vsel %vm1823, %v2789, %v2677
      %v2822 = vsel %vm1823, %v2790, %v2679
      %v2823 = vsel %vm1823, %v2791, %v2681
      %v2824 = vsel %vm1823, %v2792, %v2683
      %v2825 = vsel %vm1823, %v2793, %v2685
      %v2826 = vsel %vm1823, %v2794, %v2687
      %v2827 = vsel %vm1823, %v2795, %v2689
      %v2828 = vsel %vm1823, %v2796, %v2691
      %v2829 = vsel %vm1823, %v2797, %v2693
      %v2830 = vsel %vm1823, %v2798, %v2695
      %v2831 = vsel %vm1823, %v2799, %v2697
      %v2832 = vsel %vm1823, %v2800, %v2699
      %v2833 = vsel %vm1823, %v2801, %v2701
      %v2834 = vsel %vm1823, %v2802, %v2703
      %v2835 = vsel %vm1823, %v2803, %v2705
      %v2836 = vsel %vm1823, %v2804, %v2707
      %v2837 = vsel %vm1823, %v2805, %v2709
      %v2838 = vld [vmem:[%s3] sm:$0xff]
      %v2839 = vld [vmem:[%s3 + $0x8] sm:$0xff]
      %v2840 = vld [vmem:[%s3 + $0x10] sm:$0xff]
      %v2841 = vld [vmem:[%s3 + $0x18] sm:$0xff]
      %v2842 = vld [vmem:[%s4] sm:$0x1]
      %v2844 = vperm.slane %v2842, 0
      %v2847 = vsel %vm1889, %v2806, 0
      %v2850 = vsel %vm1889, %v2807, 0
      %v2853 = vsel %vm1889, %v2808, 0
      %v2856 = vsel %vm1889, %v2809, 0
      %v2859 = vsel %vm1889, %v2810, 0
      %v2862 = vsel %vm1889, %v2811, 0
      %v2865 = vsel %vm1889, %v2812, 0
      %v2868 = vsel %vm1889, %v2813, 0
      %v2871 = vsel %vm1889, %v2814, 0
      %v2874 = vsel %vm1889, %v2815, 0
      %v2877 = vsel %vm1889, %v2816, 0
      %v2880 = vsel %vm1889, %v2817, 0
      %v2883 = vsel %vm1889, %v2818, 0
      %v2886 = vsel %vm1889, %v2819, 0
      %v2889 = vsel %vm1889, %v2820, 0
      %v2892 = vsel %vm1889, %v2821, 0
      %v2895 = vsel %vm1889, %v2822, 0
      %v2898 = vsel %vm1889, %v2823, 0
      %v2901 = vsel %vm1889, %v2824, 0
      %v2904 = vsel %vm1889, %v2825, 0
      %v2907 = vsel %vm1889, %v2826, 0
      %v2910 = vsel %vm1889, %v2827, 0
      %v2913 = vsel %vm1889, %v2828, 0
      %v2916 = vsel %vm1889, %v2829, 0
      %v2919 = vsel %vm1889, %v2830, 0
      %v2922 = vsel %vm1889, %v2831, 0
      %v2925 = vsel %vm1889, %v2832, 0
      %v2928 = vsel %vm1889, %v2833, 0
      %v2931 = vsel %vm1889, %v2834, 0
      %v2934 = vsel %vm1889, %v2835, 0
      %v2937 = vsel %vm1889, %v2836, 0
      %v2940 = vsel %vm1889, %v2837, 0
      %2942 = vmatpush.msra.mxu0 0.0
      %2943 = vmatpush.msra.mxu0 0.0
      %2944 = vmatpush.msra.mxu0 0.0
      %2945 = vmatpush.msra.mxu0 0.0
      %2946 = vmatpush.msra.mxu0 0.0
      %2947 = vmatpush.msra.mxu0 0.0
      %2948 = vmatpush.msra.mxu0 0.0
      %2949 = vmatpush.msra.mxu0 0.0
      %2950 = vmatpush.msra.mxu0 0.0
      %2951 = vmatpush.msra.mxu0 0.0
      %2952 = vmatpush.msra.mxu0 0.0
      %2953 = vmatpush.msra.mxu0 0.0
      %2954 = vmatpush.msra.mxu0 %v2841
      %2955 = vmatpush.msra.mxu0 %v2840
      %2956 = vmatpush.msra.mxu0 %v2839
      %2957 = vmatpush.msra.mxu0 %v2838
      %2958 = vmatmul.f32.gmra.mxu0 %v2847
      %v2959 = vpop.f32.mrf.mxu0
      %v2960 = vadd.f32 %v2844, %v2959
      %2961 = vmatmul.f32.gmra.mxu0 %v2850
      %v2962 = vpop.f32.mrf.mxu0
      %v2963 = vadd.f32 %v2844, %v2962
      %2964 = vmatmul.f32.gmra.mxu0 %v2853
      %v2965 = vpop.f32.mrf.mxu0
      %v2966 = vadd.f32 %v2844, %v2965
      %2967 = vmatmul.f32.gmra.mxu0 %v2856
      %v2968 = vpop.f32.mrf.mxu0
      %v2969 = vadd.f32 %v2844, %v2968
      %2970 = vmatmul.f32.gmra.mxu0 %v2859
      %v2971 = vpop.f32.mrf.mxu0
      %v2972 = vadd.f32 %v2844, %v2971
      %2973 = vmatmul.f32.gmra.mxu0 %v2862
      %v2974 = vpop.f32.mrf.mxu0
      %v2975 = vadd.f32 %v2844, %v2974
      %2976 = vmatmul.f32.gmra.mxu0 %v2865
      %v2977 = vpop.f32.mrf.mxu0
      %v2978 = vadd.f32 %v2844, %v2977
      %2979 = vmatmul.f32.gmra.mxu0 %v2868
      %v2980 = vpop.f32.mrf.mxu0
      %v2981 = vadd.f32 %v2844, %v2980
      %2982 = vmatmul.f32.gmra.mxu0 %v2871
      %v2983 = vpop.f32.mrf.mxu0
      %v2984 = vadd.f32 %v2844, %v2983
      %2985 = vmatmul.f32.gmra.mxu0 %v2874
      %v2986 = vpop.f32.mrf.mxu0
      %v2987 = vadd.f32 %v2844, %v2986
      %2988 = vmatmul.f32.gmra.mxu0 %v2877
      %v2989 = vpop.f32.mrf.mxu0
      %v2990 = vadd.f32 %v2844, %v2989
      %2991 = vmatmul.f32.gmra.mxu0 %v2880
      %v2992 = vpop.f32.mrf.mxu0
      %v2993 = vadd.f32 %v2844, %v2992
      %2994 = vmatmul.f32.gmra.mxu0 %v2883
      %v2995 = vpop.f32.mrf.mxu0
      %v2996 = vadd.f32 %v2844, %v2995
      %2997 = vmatmul.f32.gmra.mxu0 %v2886
      %v2998 = vpop.f32.mrf.mxu0
      %v2999 = vadd.f32 %v2844, %v2998
      %3000 = vmatmul.f32.gmra.mxu0 %v2889
      %v3001 = vpop.f32.mrf.mxu0
      %v3002 = vadd.f32 %v2844, %v3001
      %3003 = vmatmul.f32.gmra.mxu0 %v2892
      %v3004 = vpop.f32.mrf.mxu0
      %v3005 = vadd.f32 %v2844, %v3004
      %3006 = vmatmul.f32.gmra.mxu0 %v2895
      %v3007 = vpop.f32.mrf.mxu0
      %v3008 = vadd.f32 %v2844, %v3007
      %3009 = vmatmul.f32.gmra.mxu0 %v2898
      %v3010 = vpop.f32.mrf.mxu0
      %v3011 = vadd.f32 %v2844, %v3010
      %3012 = vmatmul.f32.gmra.mxu0 %v2901
      %v3013 = vpop.f32.mrf.mxu0
      %v3014 = vadd.f32 %v2844, %v3013
      %3015 = vmatmul.f32.gmra.mxu0 %v2904
      %v3016 = vpop.f32.mrf.mxu0
      %v3017 = vadd.f32 %v2844, %v3016
      %3018 = vmatmul.f32.gmra.mxu0 %v2907
      %v3019 = vpop.f32.mrf.mxu0
      %v3020 = vadd.f32 %v2844, %v3019
      %3021 = vmatmul.f32.gmra.mxu0 %v2910
      %v3022 = vpop.f32.mrf.mxu0
      %v3023 = vadd.f32 %v2844, %v3022
      %3024 = vmatmul.f32.gmra.mxu0 %v2913
      %v3025 = vpop.f32.mrf.mxu0
      %v3026 = vadd.f32 %v2844, %v3025
      %3027 = vmatmul.f32.gmra.mxu0 %v2916
      %v3028 = vpop.f32.mrf.mxu0
      %v3029 = vadd.f32 %v2844, %v3028
      %3030 = vmatmul.f32.gmra.mxu0 %v2919
      %v3031 = vpop.f32.mrf.mxu0
      %v3032 = vadd.f32 %v2844, %v3031
      %3033 = vmatmul.f32.gmra.mxu0 %v2922
      %v3034 = vpop.f32.mrf.mxu0
      %v3035 = vadd.f32 %v2844, %v3034
      %3036 = vmatmul.f32.gmra.mxu0 %v2925
      %v3037 = vpop.f32.mrf.mxu0
      %v3038 = vadd.f32 %v2844, %v3037
      %3039 = vmatmul.f32.gmra.mxu0 %v2928
      %v3040 = vpop.f32.mrf.mxu0
      %v3041 = vadd.f32 %v2844, %v3040
      %3042 = vmatmul.f32.gmra.mxu0 %v2931
      %v3043 = vpop.f32.mrf.mxu0
      %v3044 = vadd.f32 %v2844, %v3043
      %3045 = vmatmul.f32.gmra.mxu0 %v2934
      %v3046 = vpop.f32.mrf.mxu0
      %v3047 = vadd.f32 %v2844, %v3046
      %3048 = vmatmul.f32.gmra.mxu0 %v2937
      %v3049 = vpop.f32.mrf.mxu0
      %v3050 = vadd.f32 %v2844, %v3049
      %3051 = vmatmul.f32.gmra.mxu0 %v2940
      %v3052 = vpop.f32.mrf.mxu0
      %v3053 = vadd.f32 %v2844, %v3052
      %3054 = vdwg.mxu0
      %v3055 = vmax.f32 %v2960, 0.0
      %v3056 = vmax.f32 %v2963, 0.0
      %v3057 = vmax.f32 %v2966, 0.0
      %v3058 = vmax.f32 %v2969, 0.0
      %v3059 = vmax.f32 %v2972, 0.0
      %v3060 = vmax.f32 %v2975, 0.0
      %v3061 = vmax.f32 %v2978, 0.0
      %v3062 = vmax.f32 %v2981, 0.0
      %v3063 = vmax.f32 %v2984, 0.0
      %v3064 = vmax.f32 %v2987, 0.0
      %v3065 = vmax.f32 %v2990, 0.0
      %v3066 = vmax.f32 %v2993, 0.0
      %v3067 = vmax.f32 %v2996, 0.0
      %v3068 = vmax.f32 %v2999, 0.0
      %v3069 = vmax.f32 %v3002, 0.0
      %v3070 = vmax.f32 %v3005, 0.0
      %v3071 = vmax.f32 %v3008, 0.0
      %v3072 = vmax.f32 %v3011, 0.0
      %v3073 = vmax.f32 %v3014, 0.0
      %v3074 = vmax.f32 %v3017, 0.0
      %v3075 = vmax.f32 %v3020, 0.0
      %v3076 = vmax.f32 %v3023, 0.0
      %v3077 = vmax.f32 %v3026, 0.0
      %v3078 = vmax.f32 %v3029, 0.0
      %v3079 = vmax.f32 %v3032, 0.0
      %v3080 = vmax.f32 %v3035, 0.0
      %v3081 = vmax.f32 %v3038, 0.0
      %v3082 = vmax.f32 %v3041, 0.0
      %v3083 = vmax.f32 %v3044, 0.0
      %v3084 = vmax.f32 %v3047, 0.0
      %v3085 = vmax.f32 %v3050, 0.0
      %v3086 = vmax.f32 %v3053, 0.0
      %3087 = vxpose.xlu0.b32.start [1/16] %v3055, 128
      %3088 = vxpose.xlu0.b32.cont [2/16] %v3056, 128
      %3089 = vxpose.xlu0.b32.cont [3/16] %v3057, 128
      %3090 = vxpose.xlu0.b32.cont [4/16] %v3058, 128
      %3091 = vxpose.xlu0.b32.cont [5/16] %v3059, 128
      %3092 = vxpose.xlu0.b32.cont [6/16] %v3060, 128
      %3093 = vxpose.xlu0.b32.cont [7/16] %v3061, 128
      %3094 = vxpose.xlu0.b32.cont [8/16] %v3062, 128
      %3095 = vxpose.xlu0.b32.cont [9/16] %v3063, 128
      %3096 = vxpose.xlu0.b32.cont [10/16] %v3064, 128
      %3097 = vxpose.xlu0.b32.cont [11/16] %v3065, 128
      %3098 = vxpose.xlu0.b32.cont [12/16] %v3066, 128
      %3099 = vxpose.xlu0.b32.cont [13/16] %v3067, 128
      %3100 = vxpose.xlu0.b32.cont [14/16] %v3068, 128
      %3101 = vxpose.xlu0.b32.cont [15/16] %v3069, 128
      %3102 = vxpose.xlu0.b32.end [16/16] %v3070, 128
      %v3103 = vpop.trf.xlu0
      %v3104 = vpop.trf.xlu0
      %v3105 = vpop.trf.xlu0
      %v3106 = vpop.trf.xlu0
      %v3107 = vpop.trf.xlu0
      %v3108 = vpop.trf.xlu0
      %v3109 = vpop.trf.xlu0
      %v3110 = vpop.trf.xlu0
      %v3111 = vpop.trf.xlu0
      %v3112 = vpop.trf.xlu0
      %v3113 = vpop.trf.xlu0
      %v3114 = vpop.trf.xlu0
      %v3115 = vpop.trf.xlu0
      %v3116 = vpop.trf.xlu0
      %v3117 = vpop.trf.xlu0
      %v3118 = vpop.trf.xlu0
      %3119 = vxpose.xlu0.b32.start [1/16] %v3071, 128
      %3120 = vxpose.xlu0.b32.cont [2/16] %v3072, 128
      %3121 = vxpose.xlu0.b32.cont [3/16] %v3073, 128
      %3122 = vxpose.xlu0.b32.cont [4/16] %v3074, 128
      %3123 = vxpose.xlu0.b32.cont [5/16] %v3075, 128
      %3124 = vxpose.xlu0.b32.cont [6/16] %v3076, 128
      %3125 = vxpose.xlu0.b32.cont [7/16] %v3077, 128
      %3126 = vxpose.xlu0.b32.cont [8/16] %v3078, 128
      %3127 = vxpose.xlu0.b32.cont [9/16] %v3079, 128
      %3128 = vxpose.xlu0.b32.cont [10/16] %v3080, 128
      %3129 = vxpose.xlu0.b32.cont [11/16] %v3081, 128
      %3130 = vxpose.xlu0.b32.cont [12/16] %v3082, 128
      %3131 = vxpose.xlu0.b32.cont [13/16] %v3083, 128
      %3132 = vxpose.xlu0.b32.cont [14/16] %v3084, 128
      %3133 = vxpose.xlu0.b32.cont [15/16] %v3085, 128
      %3134 = vxpose.xlu0.b32.end [16/16] %v3086, 128
      %v3135 = vpop.trf.xlu0
      %v3136 = vpop.trf.xlu0
      %v3137 = vpop.trf.xlu0
      %v3138 = vpop.trf.xlu0
      %v3139 = vpop.trf.xlu0
      %v3140 = vpop.trf.xlu0
      %v3141 = vpop.trf.xlu0
      %v3142 = vpop.trf.xlu0
      %v3143 = vpop.trf.xlu0
      %v3144 = vpop.trf.xlu0
      %v3145 = vpop.trf.xlu0
      %v3146 = vpop.trf.xlu0
      %v3147 = vpop.trf.xlu0
      %v3148 = vpop.trf.xlu0
      %v3149 = vpop.trf.xlu0
      %v3150 = vpop.trf.xlu0
      %3151 = vst [vmem:[%s224] sm:$0xff] %v3103
      %3152 = vst [vmem:[%s224 + $0x8] sm:$0xff] %v3135
      %3153 = vst [vmem:[%s224 + $0x10] sm:$0xff] %v3104
      %3154 = vst [vmem:[%s224 + $0x18] sm:$0xff] %v3136
      %p3155 = scmp.lt.s32.totalorder %s16, 1
      %s3156 = scalar_select %p3155, %s16, 1
      %s3157 = smul.addr %s3156, 4
      %s3158 = smul.addr %s3157, 8
      %s3159 = scalar_lea.vmem %s5, %s3158
      // Predicated region
      $region41: #{decoder_block.1} parent=39 // pred_check
        %p3160 = pneg %p144
      $region42: #{decoder_block.1} parent=39 // pred_check_branch
        %3162 = sbr.rel (%p3160) target = $region44
      $region43: #{decoder_block.1} parent=39 // pred_region
        _
      $region44: #{decoder_block.1} parent=39 // pred_fallthru
        _
    $region40: #{decoder_block.1} parent=5 // pred_fallthru
      _
    %p3163 = scmp.le.s32.totalorder 2, %s11
    // Predicated region
    $region45: #{decoder_block.1} parent=5 // pred_check
      %p3164 = pneg %p3163
    $region46: #{decoder_block.1} parent=5 // pred_check_branch
      %3166 = sbr.rel (%p3164) target = $region48
    $region47: #{decoder_block.1} parent=5 // pred_region
      %s3167 = ssub.s32 %s11, 2
      // Predicated region
      $region49: #{decoder_block.1} parent=47 // pred_check
        %p3168 = pneg %p150
      $region50: #{decoder_block.1} parent=47 // pred_check_branch
        %3170 = sbr.rel (%p3168) target = $region52
      $region51: #{decoder_block.1} parent=47 // pred_region
        %p3171 = scmp.lt.s32.totalorder %s17, 1
        %s3172 = scalar_select %p3171, %s17, 1
        %s3173 = smul.addr %s3172, 4
        %s3174 = smul.addr %s3173, 8
        %s3175 = scalar_lea.vmem %s5, %s3174
      $region52: #{decoder_block.1} parent=47 // pred_fallthru
        _
    $region48: #{decoder_block.1} parent=5 // pred_fallthru
      _
  $region6: #{decoder_block.1} parent=0 // loop_footer
    %s15 = sadd.s32 1, %s11
  $region7: #{decoder_block.1} parent=0 // loop_footer_branch
    %10 = sbr.rel target = $region3
  $region8: #{decoder_block.1} parent=0 // loop_exit
    _

</llo_original>
